<compile_context>
chip_gen: v7x
topology: tpu7x:2x2x1
jax: 0.10.0
libtpu: 0.0.40
codegen_flags: <defaults>
</compile_context>

<pallas_src>
import functools

import numpy as np
import jax
import jax.numpy as jnp
from jax import lax
from jax.experimental import pallas as pl
from jax.experimental.pallas import tpu as pltpu


# ----------------------------------------------------------------------------
# Packed-operand layouts (shared by the wrapper-side packer and the kernel).
# ----------------------------------------------------------------------------
def _wbig_layout(D, H):
    D2, H2 = 2 * D, 2 * H
    return dict(wih=0, whh=D2, wp=D2 + H2, rows=D2 + 2 * H2)


def _aux_layout(B):
    B2 = 2 * B
    r_bias = 0
    r_bp = B2
    r_len = max(8, ((B2 + 1 + 7) // 8) * 8)          # 8-row aligned region
    rows = ((r_len + B2 + 7) // 8) * 8
    return dict(bias=r_bias, bp=r_bp, len=r_len, rows=rows)


# ----------------------------------------------------------------------------
# Fused kernel: BiLSTM recurrence + masked time-pooling + prediction head.
#
# Wide gate layout: gate block k (k = i,f,g,o) spans lanes [2H*k, 2H*(k+1));
# within a block, [0:H) is the forward direction, [H:2H) the backward one.
# Rows 0..B-1 are forward sequences, rows B..2B-1 backward (reversed) ones.
# ----------------------------------------------------------------------------
def bilstm_attn_kernel(x2_ref, w_ref, aux_ref, out_ref, *, S, B, D, H):
    B2, D2, H2, H8 = 2 * B, 2 * D, 2 * H, 8 * H
    wl = _wbig_layout(D, H)
    al = _aux_layout(B)

    wih2 = w_ref[wl["wih"]:wl["wih"] + D2, :]              # (2D, 8H) block-diag
    whh2 = w_ref[wl["whh"]:wl["whh"] + H2, :]              # (2H, 8H) block-diag
    wp = w_ref[wl["wp"]:wl["wp"] + H2, 0:2]                # (2H, 2) prediction head

    bias2 = aux_ref[al["bias"]:al["bias"] + B2, :]         # (2B, 8H) per-row biases
    bp = aux_ref[al["bp"]:al["bp"] + 1, 0:2]               # (1, 2)
    len_col = aux_ref[al["len"]:al["len"] + B2, 0:1]       # (2B, 1) lengths (f32)

    # Hoisted input projection over ALL timesteps and BOTH directions:
    # a single well-shaped MXU call outside the serial recurrence.
    xp = jnp.dot(x2_ref[...], wih2,
                 preferred_element_type=jnp.float32)       # (S*2B, 8H)

    lane = lax.broadcasted_iota(jnp.int32, (B2, H8), 1)
    g_lanes = (lane >= 4 * H) & (lane < 6 * H)             # cell-gate (tanh) lanes

    h2 = jnp.zeros((B2, H2), jnp.float32)                  # [h_fwd|0] / [0|h_bwd]
    c2 = jnp.zeros((B2, H2), jnp.float32)
    acc2 = jnp.zeros((B2, H2), jnp.float32)                # masked sum of hidden states

    # Fully-unrolled recurrence: per step, ONE MXU call + full-width EUP +
    # a few VPU ops.  The zero halves of h2/c2 are self-maintaining because
    # the inactive gate pre-activations are exactly zero (block-diag weights).
    for t in range(S):
        pre = xp[t * B2:(t + 1) * B2, :] + bias2           # not on the h-dep chain
        gates = pre + jnp.dot(h2, whh2,
                              preferred_element_type=jnp.float32)   # (2B, 8H)
        act = jnp.where(g_lanes, jnp.tanh(gates), jax.nn.sigmoid(gates))
        i_w = act[:, 0 * H2:1 * H2]                        # 2H-wide, lane-block slices
        f_w = act[:, 1 * H2:2 * H2]
        g_w = act[:, 2 * H2:3 * H2]
        o_w = act[:, 3 * H2:4 * H2]
        c2 = f_w * c2 + i_w * g_w
        h2 = o_w * jnp.tanh(c2)
        valid_t = (len_col > jnp.float32(t)).astype(jnp.float32)    # (2B,1), off chain
        acc2 = acc2 + h2 * valid_t

    # Attention epilogue: softmax over a size-1 axis in the reference is
    # identically 1.0 and padded positions are zero, so attention pooling ==
    # masked sum over time.  Fwd rows hold [sum_hf | 0], bwd rows [0 | sum_hb];
    # adding the row halves yields the (B, 2H) pooled vector with no concat.
    pooled = acc2[0:B, :] + acc2[B:B2, :]                  # (B, 2H)
    out_ref[...] = jnp.dot(pooled, wp,
                           preferred_element_type=jnp.float32) + bp  # (B, 2)


def run_fused(x2_flat, w_big, aux, *, S, B, D, H):
    kernel = functools.partial(bilstm_attn_kernel, S=S, B=B, D=D, H=H)
    vmem = pl.BlockSpec(memory_space=pltpu.MemorySpace.VMEM)
    return pl.pallas_call(
        kernel,
        out_shape=jax.ShapeDtypeStruct((B, 2), jnp.float32),
        in_specs=[vmem, vmem, vmem],
        out_specs=vmem,
    )(x2_flat, w_big, aux)


# ----------------------------------------------------------------------------
# Wrapper-side parameter packing (done once).
# ----------------------------------------------------------------------------
def pack_params(raw, B):
    D = raw["wih_f"].shape[0]
    H = raw["whh_f"].shape[0]
    D2, H2, H8 = 2 * D, 2 * H, 8 * H
    wl = _wbig_layout(D, H)
    al = _aux_layout(B)

    wih2 = jnp.zeros((D2, H8), jnp.float32)
    whh2 = jnp.zeros((H2, H8), jnp.float32)
    bwide_f = jnp.zeros((H8,), jnp.float32)
    bwide_b = jnp.zeros((H8,), jnp.float32)
    for k in range(4):                                     # PyTorch gate order i,f,g,o
        src = slice(H * k, H * (k + 1))
        dst_f = slice(H2 * k, H2 * k + H)
        dst_b = slice(H2 * k + H, H2 * (k + 1))
        wih2 = wih2.at[0:D, dst_f].set(raw["wih_f"][:, src])
        wih2 = wih2.at[D:D2, dst_b].set(raw["wih_b"][:, src])
        whh2 = whh2.at[0:H, dst_f].set(raw["whh_f"][:, src])
        whh2 = whh2.at[H:H2, dst_b].set(raw["whh_b"][:, src])
        bwide_f = bwide_f.at[dst_f].set(raw["b_f"][src])
        bwide_b = bwide_b.at[dst_b].set(raw["b_b"][src])

    w_big = jnp.zeros((wl["rows"], H8), jnp.float32)
    w_big = w_big.at[wl["wih"]:wl["wih"] + D2, :].set(wih2)
    w_big = w_big.at[wl["whh"]:wl["whh"] + H2, :].set(whh2)
    w_big = w_big.at[wl["wp"]:wl["wp"] + H2, 0:2].set(raw["wp"])

    bias2 = jnp.concatenate([jnp.tile(bwide_f[None, :], (B, 1)),
                             jnp.tile(bwide_b[None, :], (B, 1))], axis=0)  # (2B, 8H)
    aux_base = jnp.zeros((al["rows"], H8), jnp.float32)
    aux_base = aux_base.at[al["bias"]:al["bias"] + 2 * B, :].set(bias2)
    aux_base = aux_base.at[al["bp"], 0:2].set(raw["bp"])
    return w_big, aux_base


# ----------------------------------------------------------------------------
# Full forward pass.  Embedding gather + per-length reversal stay as XLA glue
# (data-dependent gathers; no benefit in Pallas at these sizes).
# ----------------------------------------------------------------------------
def model_forward(params, text, lengths, labels):
    B, S = text.shape
    raw = params["raw"]
    D = raw["emb"].shape[1]
    H = raw["whh_f"].shape[0]
    al = _aux_layout(B)

    tok = jnp.take(raw["emb"], text, axis=0)               # (B, S, D); pad row is zero
    t_idx = jnp.arange(S)[None, :]
    rev_idx = jnp.clip(lengths[:, None] - 1 - t_idx, 0, S - 1)
    # Per-sequence reversed input for the backward direction.  Steps t >= length
    # are processed AFTER the valid ones and their outputs are masked, so they
    # never influence the pooled result (h_n/c_n are not consumed anywhere).
    tok_rev = jnp.take_along_axis(tok, rev_idx[..., None], axis=1)

    xf = jnp.transpose(tok, (1, 0, 2))                     # (S, B, D) time-major
    xb = jnp.transpose(tok_rev, (1, 0, 2))
    z = jnp.zeros_like(xf)
    # Block-diagonal input rows: fwd rows [x | 0], bwd rows [0 | x].
    x2 = jnp.concatenate([jnp.concatenate([xf, z], axis=-1),
                          jnp.concatenate([z, xb], axis=-1)], axis=1)  # (S, 2B, 2D)
    x2_flat = x2.reshape(S * 2 * B, 2 * D)

    len2 = jnp.concatenate([lengths, lengths]).astype(jnp.float32)     # (2B,)
    aux = params["aux_base"].at[al["len"]:al["len"] + 2 * B, 0].set(len2)

    preds = run_fused(x2_flat, params["w_big"], aux, S=S, B=B, D=D, H=H)
    return preds, labels


# ----------------------------------------------------------------------------
# Pure-JAX reference of the module's forward (for the correctness check).
# ----------------------------------------------------------------------------
def reference_forward(raw, text, lengths):
    H = raw["whh_f"].shape[0]
    B, S = text.shape

    tok = jnp.take(raw["emb"], text, axis=0)               # (B, S, D)
    t_idx = jnp.arange(S)[None, :]
    valid = (t_idx < lengths[:, None]).astype(jnp.float32)  # (B, S)
    rev_idx = jnp.clip(lengths[:, None] - 1 - t_idx, 0, S - 1)
    tok_rev = jnp.take_along_axis(tok, rev_idx[..., None], axis=1)

    def run_dir(x_btd, wih, whh, b):
        def step(carry, x_t):
            h, c = carry
            gates = x_t @ wih + h @ whh + b                # (B, 4H), order i|f|g|o
            i = jax.nn.sigmoid(gates[:, 0 * H:1 * H])
            f = jax.nn.sigmoid(gates[:, 1 * H:2 * H])
            g = jnp.tanh(gates[:, 2 * H:3 * H])
            o = jax.nn.sigmoid(gates[:, 3 * H:4 * H])
            c = f * c + i * g
            h = o * jnp.tanh(c)
            return (h, c), h
        zz = jnp.zeros((B, H), jnp.float32)
        _, hs = lax.scan(step, (zz, zz), jnp.swapaxes(x_btd, 0, 1))
        return jnp.swapaxes(hs, 0, 1)                      # (B, S, H)

    hf = run_dir(tok, raw["wih_f"], raw["whh_f"], raw["b_f"])
    hb = run_dir(tok_rev, raw["wih_b"], raw["whh_b"], raw["b_b"])
    # softmax over the size-1 axis of att_weights == 1.0 and padded BiLSTM
    # outputs are zero -> attention pooling == masked sum over time.
    sum_f = jnp.sum(hf * valid[..., None], axis=1)
    sum_b = jnp.sum(hb * valid[..., None], axis=1)
    pooled = jnp.concatenate([sum_f, sum_b], axis=-1)      # (B, 2H)
    return pooled @ raw["wp"] + raw["bp"]


# ----------------------------------------------------------------------------
# Deterministic parameter construction.
# ----------------------------------------------------------------------------
def make_params(key, vocab, D, H, B):
    ks = jax.random.split(key, 14)
    u = lambda k, shape, s: jax.random.uniform(k, shape, jnp.float32, -s, s)
    inv = H ** -0.5
    inv2 = (2 * H) ** -0.5

    emb = u(ks[0], (vocab, D), 0.1).at[0].set(0.0)         # padding_idx=0

    raw = dict(
        emb=emb,
        wih_f=u(ks[1], (D, 4 * H), inv), whh_f=u(ks[2], (H, 4 * H), inv),
        b_f=u(ks[3], (4 * H,), inv) + u(ks[4], (4 * H,), inv),   # b_ih + b_hh pre-summed
        wih_b=u(ks[5], (D, 4 * H), inv), whh_b=u(ks[6], (H, 4 * H), inv),
        b_b=u(ks[7], (4 * H,), inv) + u(ks[8], (4 * H,), inv),
        # Attention key/query params exist in the reference module but are
        # provably output-invariant (softmax over a size-1 axis == 1.0);
        # materialized only to mirror the original parameter set.
        wk=u(ks[9], (2 * H, 2 * H), inv2), bk=u(ks[10], (2 * H,), inv2),
        wq=u(ks[11], (2 * H, 1), inv2),
        wp=u(ks[12], (2 * H, 2), inv2), bp=u(ks[13], (2,), inv2),
    )
    w_big, aux_base = pack_params(raw, B)
    return dict(raw=raw, w_big=w_big, aux_base=aux_base)


if __name__ == "__main__":
    B, S, D, H, VOCAB = 2, 8, 32, 32, 20

    key = jax.random.PRNGKey(0)
    kp, kt, kl = jax.random.split(key, 3)

    params = make_params(kp, VOCAB, D, H, B)

    lengths = jnp.array([8, 5], dtype=jnp.int32)
    toks = jax.random.randint(kt, (B, S), 1, VOCAB, dtype=jnp.int32)
    pad_mask = jnp.arange(S)[None, :] < lengths[:, None]
    text = jnp.where(pad_mask, toks, 0).astype(jnp.int32)
    labels = jax.random.randint(kl, (B,), 0, 2, dtype=jnp.int32)

    preds, out_labels = jax.jit(model_forward)(params, text, lengths, labels)
    jax.block_until_ready(preds)
    jax.block_until_ready(out_labels)

    assert preds.shape == (B, 2) and preds.dtype == jnp.float32
    assert out_labels.shape == (B,)

    # Correctness check against the pure-JAX reference of the module forward.
    ref = jax.jit(reference_forward)(params["raw"], text, lengths)
    np.testing.assert_allclose(np.asarray(preds), np.asarray(ref),
                               rtol=5e-3, atol=5e-3)
    print("KERNEL_OK")
</pallas_src>

<mosaic_0001>
module attributes {stable_mosaic.version = 11 : i64} {
  func.func @bilstm_attn_kernel(%arg0: memref<32x64xf32, #tpu.memory_space<vmem>>, %arg1: memref<192x256xf32, #tpu.memory_space<vmem>>, %arg2: memref<16x256xf32, #tpu.memory_space<vmem>>, %arg3: memref<2x2xf32, #tpu.memory_space<vmem>>) attributes {dimension_semantics = [], scalar_prefetch = 0 : i64, scratch_operands = 0 : i64, tpu.core_type = #tpu.core_type<tc>} {
    %c0 = arith.constant 0 : index
    %c0_0 = arith.constant 0 : index
    %0 = vector.load %arg1[%c0, %c0_0] : memref<192x256xf32, #tpu.memory_space<vmem>>, vector<64x256xf32>
    %c64 = arith.constant 64 : index
    %c0_1 = arith.constant 0 : index
    %1 = vector.load %arg1[%c64, %c0_1] : memref<192x256xf32, #tpu.memory_space<vmem>>, vector<64x256xf32>
    %c128 = arith.constant 128 : index
    %c0_2 = arith.constant 0 : index
    %2 = vector.load %arg1[%c128, %c0_2] : memref<192x256xf32, #tpu.memory_space<vmem>>, vector<64x2xf32>
    %c0_3 = arith.constant 0 : index
    %c0_4 = arith.constant 0 : index
    %3 = vector.load %arg2[%c0_3, %c0_4] : memref<16x256xf32, #tpu.memory_space<vmem>>, vector<4x256xf32>
    %c4 = arith.constant 4 : index
    %c0_5 = arith.constant 0 : index
    %4 = vector.load %arg2[%c4, %c0_5] : memref<16x256xf32, #tpu.memory_space<vmem>>, vector<1x2xf32>
    %c8 = arith.constant 8 : index
    %c0_6 = arith.constant 0 : index
    %5 = vector.load %arg2[%c8, %c0_6] : memref<16x256xf32, #tpu.memory_space<vmem>>, vector<4x1xf32>
    %c0_7 = arith.constant 0 : index
    %c0_8 = arith.constant 0 : index
    %6 = vector.load %arg0[%c0_7, %c0_8] : memref<32x64xf32, #tpu.memory_space<vmem>>, vector<32x64xf32>
    %cst = arith.constant dense<0.000000e+00> : vector<32x256xf32>
    %7 = tpu.matmul %6, %0, %cst {dimension_numbers = #tpu.dot_dimension_numbers<[1], [0], [0], [1], [0, 0, 1, 1], [], []>} : vector<32x64xf32>, vector<64x256xf32>, vector<32x256xf32> -> vector<32x256xf32>
    %8 = tpu.iota {dimensions = array<i32: 1>} : vector<4x256xi32>
    %c128_i32 = arith.constant 128 : i32
    %9 = vector.broadcast %c128_i32 : i32 to vector<4x256xi32>
    %10 = arith.cmpi sge, %8, %9 : vector<4x256xi32>
    %c192_i32 = arith.constant 192 : i32
    %11 = vector.broadcast %c192_i32 : i32 to vector<4x256xi32>
    %12 = arith.cmpi slt, %8, %11 : vector<4x256xi32>
    %13 = arith.andi %10, %12 : vector<4x256xi1>
    %cst_9 = arith.constant 0.000000e+00 : f32
    %14 = vector.broadcast %cst_9 : f32 to vector<4x64xf32>
    %cst_10 = arith.constant 0.000000e+00 : f32
    %15 = vector.broadcast %cst_10 : f32 to vector<4x64xf32>
    %cst_11 = arith.constant 0.000000e+00 : f32
    %16 = vector.broadcast %cst_11 : f32 to vector<4x64xf32>
    %17 = vector.extract_strided_slice %7 {offsets = [0, 0], sizes = [4, 256], strides = [1, 1]} : vector<32x256xf32> to vector<4x256xf32>
    %18 = arith.addf %17, %3 : vector<4x256xf32>
    %cst_12 = arith.constant dense<0.000000e+00> : vector<4x256xf32>
    %19 = tpu.matmul %14, %1, %cst_12 {dimension_numbers = #tpu.dot_dimension_numbers<[1], [0], [0], [1], [0, 0, 1, 1], [], []>} : vector<4x64xf32>, vector<64x256xf32>, vector<4x256xf32> -> vector<4x256xf32>
    %20 = arith.addf %18, %19 : vector<4x256xf32>
    %21 = math.tanh %20 : vector<4x256xf32>
    %22 = arith.negf %20 : vector<4x256xf32>
    %23 = math.exp %22 : vector<4x256xf32>
    %cst_13 = arith.constant 1.000000e+00 : f32
    %24 = vector.broadcast %cst_13 : f32 to vector<4x256xf32>
    %25 = arith.addf %24, %23 : vector<4x256xf32>
    %26 = arith.divf %24, %25 : vector<4x256xf32>
    %27 = arith.select %13, %21, %26 : vector<4x256xi1>, vector<4x256xf32>
    %28 = vector.extract_strided_slice %27 {offsets = [0, 0], sizes = [4, 64], strides = [1, 1]} : vector<4x256xf32> to vector<4x64xf32>
    %29 = vector.extract_strided_slice %27 {offsets = [0, 64], sizes = [4, 64], strides = [1, 1]} : vector<4x256xf32> to vector<4x64xf32>
    %30 = vector.extract_strided_slice %27 {offsets = [0, 128], sizes = [4, 64], strides = [1, 1]} : vector<4x256xf32> to vector<4x64xf32>
    %31 = vector.extract_strided_slice %27 {offsets = [0, 192], sizes = [4, 64], strides = [1, 1]} : vector<4x256xf32> to vector<4x64xf32>
    %32 = arith.mulf %29, %15 : vector<4x64xf32>
    %33 = arith.mulf %28, %30 : vector<4x64xf32>
    %34 = arith.addf %32, %33 : vector<4x64xf32>
    %35 = math.tanh %34 : vector<4x64xf32>
    %36 = arith.mulf %31, %35 : vector<4x64xf32>
    %cst_14 = arith.constant 0.000000e+00 : f32
    %37 = vector.broadcast %cst_14 : f32 to vector<4x1xf32>
    %38 = arith.cmpf ogt, %5, %37 : vector<4x1xf32>
    %39 = arith.extui %38 : vector<4x1xi1> to vector<4x1xi32>
    %40 = arith.sitofp %39 : vector<4x1xi32> to vector<4x1xf32>
    %41 = vector.broadcast %40 : vector<4x1xf32> to vector<4x64xf32>
    %42 = arith.mulf %36, %41 : vector<4x64xf32>
    %43 = arith.addf %16, %42 : vector<4x64xf32>
    %44 = vector.extract_strided_slice %7 {offsets = [4, 0], sizes = [4, 256], strides = [1, 1]} : vector<32x256xf32> to vector<4x256xf32>
    %45 = arith.addf %44, %3 : vector<4x256xf32>
    %cst_15 = arith.constant dense<0.000000e+00> : vector<4x256xf32>
    %46 = tpu.matmul %36, %1, %cst_15 {dimension_numbers = #tpu.dot_dimension_numbers<[1], [0], [0], [1], [0, 0, 1, 1], [], []>} : vector<4x64xf32>, vector<64x256xf32>, vector<4x256xf32> -> vector<4x256xf32>
    %47 = arith.addf %45, %46 : vector<4x256xf32>
    %48 = math.tanh %47 : vector<4x256xf32>
    %49 = arith.negf %47 : vector<4x256xf32>
    %50 = math.exp %49 : vector<4x256xf32>
    %cst_16 = arith.constant 1.000000e+00 : f32
    %51 = vector.broadcast %cst_16 : f32 to vector<4x256xf32>
    %52 = arith.addf %51, %50 : vector<4x256xf32>
    %53 = arith.divf %51, %52 : vector<4x256xf32>
    %54 = arith.select %13, %48, %53 : vector<4x256xi1>, vector<4x256xf32>
    %55 = vector.extract_strided_slice %54 {offsets = [0, 0], sizes = [4, 64], strides = [1, 1]} : vector<4x256xf32> to vector<4x64xf32>
    %56 = vector.extract_strided_slice %54 {offsets = [0, 64], sizes = [4, 64], strides = [1, 1]} : vector<4x256xf32> to vector<4x64xf32>
    %57 = vector.extract_strided_slice %54 {offsets = [0, 128], sizes = [4, 64], strides = [1, 1]} : vector<4x256xf32> to vector<4x64xf32>
    %58 = vector.extract_strided_slice %54 {offsets = [0, 192], sizes = [4, 64], strides = [1, 1]} : vector<4x256xf32> to vector<4x64xf32>
    %59 = arith.mulf %56, %34 : vector<4x64xf32>
    %60 = arith.mulf %55, %57 : vector<4x64xf32>
    %61 = arith.addf %59, %60 : vector<4x64xf32>
    %62 = math.tanh %61 : vector<4x64xf32>
    %63 = arith.mulf %58, %62 : vector<4x64xf32>
    %cst_17 = arith.constant 1.000000e+00 : f32
    %64 = vector.broadcast %cst_17 : f32 to vector<4x1xf32>
    %65 = arith.cmpf ogt, %5, %64 : vector<4x1xf32>
    %66 = arith.extui %65 : vector<4x1xi1> to vector<4x1xi32>
    %67 = arith.sitofp %66 : vector<4x1xi32> to vector<4x1xf32>
    %68 = vector.broadcast %67 : vector<4x1xf32> to vector<4x64xf32>
    %69 = arith.mulf %63, %68 : vector<4x64xf32>
    %70 = arith.addf %43, %69 : vector<4x64xf32>
    %71 = vector.extract_strided_slice %7 {offsets = [8, 0], sizes = [4, 256], strides = [1, 1]} : vector<32x256xf32> to vector<4x256xf32>
    %72 = arith.addf %71, %3 : vector<4x256xf32>
    %cst_18 = arith.constant dense<0.000000e+00> : vector<4x256xf32>
    %73 = tpu.matmul %63, %1, %cst_18 {dimension_numbers = #tpu.dot_dimension_numbers<[1], [0], [0], [1], [0, 0, 1, 1], [], []>} : vector<4x64xf32>, vector<64x256xf32>, vector<4x256xf32> -> vector<4x256xf32>
    %74 = arith.addf %72, %73 : vector<4x256xf32>
    %75 = math.tanh %74 : vector<4x256xf32>
    %76 = arith.negf %74 : vector<4x256xf32>
    %77 = math.exp %76 : vector<4x256xf32>
    %cst_19 = arith.constant 1.000000e+00 : f32
    %78 = vector.broadcast %cst_19 : f32 to vector<4x256xf32>
    %79 = arith.addf %78, %77 : vector<4x256xf32>
    %80 = arith.divf %78, %79 : vector<4x256xf32>
    %81 = arith.select %13, %75, %80 : vector<4x256xi1>, vector<4x256xf32>
    %82 = vector.extract_strided_slice %81 {offsets = [0, 0], sizes = [4, 64], strides = [1, 1]} : vector<4x256xf32> to vector<4x64xf32>
    %83 = vector.extract_strided_slice %81 {offsets = [0, 64], sizes = [4, 64], strides = [1, 1]} : vector<4x256xf32> to vector<4x64xf32>
    %84 = vector.extract_strided_slice %81 {offsets = [0, 128], sizes = [4, 64], strides = [1, 1]} : vector<4x256xf32> to vector<4x64xf32>
    %85 = vector.extract_strided_slice %81 {offsets = [0, 192], sizes = [4, 64], strides = [1, 1]} : vector<4x256xf32> to vector<4x64xf32>
    %86 = arith.mulf %83, %61 : vector<4x64xf32>
    %87 = arith.mulf %82, %84 : vector<4x64xf32>
    %88 = arith.addf %86, %87 : vector<4x64xf32>
    %89 = math.tanh %88 : vector<4x64xf32>
    %90 = arith.mulf %85, %89 : vector<4x64xf32>
    %cst_20 = arith.constant 2.000000e+00 : f32
    %91 = vector.broadcast %cst_20 : f32 to vector<4x1xf32>
    %92 = arith.cmpf ogt, %5, %91 : vector<4x1xf32>
    %93 = arith.extui %92 : vector<4x1xi1> to vector<4x1xi32>
    %94 = arith.sitofp %93 : vector<4x1xi32> to vector<4x1xf32>
    %95 = vector.broadcast %94 : vector<4x1xf32> to vector<4x64xf32>
    %96 = arith.mulf %90, %95 : vector<4x64xf32>
    %97 = arith.addf %70, %96 : vector<4x64xf32>
    %98 = vector.extract_strided_slice %7 {offsets = [12, 0], sizes = [4, 256], strides = [1, 1]} : vector<32x256xf32> to vector<4x256xf32>
    %99 = arith.addf %98, %3 : vector<4x256xf32>
    %cst_21 = arith.constant dense<0.000000e+00> : vector<4x256xf32>
    %100 = tpu.matmul %90, %1, %cst_21 {dimension_numbers = #tpu.dot_dimension_numbers<[1], [0], [0], [1], [0, 0, 1, 1], [], []>} : vector<4x64xf32>, vector<64x256xf32>, vector<4x256xf32> -> vector<4x256xf32>
    %101 = arith.addf %99, %100 : vector<4x256xf32>
    %102 = math.tanh %101 : vector<4x256xf32>
    %103 = arith.negf %101 : vector<4x256xf32>
    %104 = math.exp %103 : vector<4x256xf32>
    %cst_22 = arith.constant 1.000000e+00 : f32
    %105 = vector.broadcast %cst_22 : f32 to vector<4x256xf32>
    %106 = arith.addf %105, %104 : vector<4x256xf32>
    %107 = arith.divf %105, %106 : vector<4x256xf32>
    %108 = arith.select %13, %102, %107 : vector<4x256xi1>, vector<4x256xf32>
    %109 = vector.extract_strided_slice %108 {offsets = [0, 0], sizes = [4, 64], strides = [1, 1]} : vector<4x256xf32> to vector<4x64xf32>
    %110 = vector.extract_strided_slice %108 {offsets = [0, 64], sizes = [4, 64], strides = [1, 1]} : vector<4x256xf32> to vector<4x64xf32>
    %111 = vector.extract_strided_slice %108 {offsets = [0, 128], sizes = [4, 64], strides = [1, 1]} : vector<4x256xf32> to vector<4x64xf32>
    %112 = vector.extract_strided_slice %108 {offsets = [0, 192], sizes = [4, 64], strides = [1, 1]} : vector<4x256xf32> to vector<4x64xf32>
    %113 = arith.mulf %110, %88 : vector<4x64xf32>
    %114 = arith.mulf %109, %111 : vector<4x64xf32>
    %115 = arith.addf %113, %114 : vector<4x64xf32>
    %116 = math.tanh %115 : vector<4x64xf32>
    %117 = arith.mulf %112, %116 : vector<4x64xf32>
    %cst_23 = arith.constant 3.000000e+00 : f32
    %118 = vector.broadcast %cst_23 : f32 to vector<4x1xf32>
    %119 = arith.cmpf ogt, %5, %118 : vector<4x1xf32>
    %120 = arith.extui %119 : vector<4x1xi1> to vector<4x1xi32>
    %121 = arith.sitofp %120 : vector<4x1xi32> to vector<4x1xf32>
    %122 = vector.broadcast %121 : vector<4x1xf32> to vector<4x64xf32>
    %123 = arith.mulf %117, %122 : vector<4x64xf32>
    %124 = arith.addf %97, %123 : vector<4x64xf32>
    %125 = vector.extract_strided_slice %7 {offsets = [16, 0], sizes = [4, 256], strides = [1, 1]} : vector<32x256xf32> to vector<4x256xf32>
    %126 = arith.addf %125, %3 : vector<4x256xf32>
    %cst_24 = arith.constant dense<0.000000e+00> : vector<4x256xf32>
    %127 = tpu.matmul %117, %1, %cst_24 {dimension_numbers = #tpu.dot_dimension_numbers<[1], [0], [0], [1], [0, 0, 1, 1], [], []>} : vector<4x64xf32>, vector<64x256xf32>, vector<4x256xf32> -> vector<4x256xf32>
    %128 = arith.addf %126, %127 : vector<4x256xf32>
    %129 = math.tanh %128 : vector<4x256xf32>
    %130 = arith.negf %128 : vector<4x256xf32>
    %131 = math.exp %130 : vector<4x256xf32>
    %cst_25 = arith.constant 1.000000e+00 : f32
    %132 = vector.broadcast %cst_25 : f32 to vector<4x256xf32>
    %133 = arith.addf %132, %131 : vector<4x256xf32>
    %134 = arith.divf %132, %133 : vector<4x256xf32>
    %135 = arith.select %13, %129, %134 : vector<4x256xi1>, vector<4x256xf32>
    %136 = vector.extract_strided_slice %135 {offsets = [0, 0], sizes = [4, 64], strides = [1, 1]} : vector<4x256xf32> to vector<4x64xf32>
    %137 = vector.extract_strided_slice %135 {offsets = [0, 64], sizes = [4, 64], strides = [1, 1]} : vector<4x256xf32> to vector<4x64xf32>
    %138 = vector.extract_strided_slice %135 {offsets = [0, 128], sizes = [4, 64], strides = [1, 1]} : vector<4x256xf32> to vector<4x64xf32>
    %139 = vector.extract_strided_slice %135 {offsets = [0, 192], sizes = [4, 64], strides = [1, 1]} : vector<4x256xf32> to vector<4x64xf32>
    %140 = arith.mulf %137, %115 : vector<4x64xf32>
    %141 = arith.mulf %136, %138 : vector<4x64xf32>
    %142 = arith.addf %140, %141 : vector<4x64xf32>
    %143 = math.tanh %142 : vector<4x64xf32>
    %144 = arith.mulf %139, %143 : vector<4x64xf32>
    %cst_26 = arith.constant 4.000000e+00 : f32
    %145 = vector.broadcast %cst_26 : f32 to vector<4x1xf32>
    %146 = arith.cmpf ogt, %5, %145 : vector<4x1xf32>
    %147 = arith.extui %146 : vector<4x1xi1> to vector<4x1xi32>
    %148 = arith.sitofp %147 : vector<4x1xi32> to vector<4x1xf32>
    %149 = vector.broadcast %148 : vector<4x1xf32> to vector<4x64xf32>
    %150 = arith.mulf %144, %149 : vector<4x64xf32>
    %151 = arith.addf %124, %150 : vector<4x64xf32>
    %152 = vector.extract_strided_slice %7 {offsets = [20, 0], sizes = [4, 256], strides = [1, 1]} : vector<32x256xf32> to vector<4x256xf32>
    %153 = arith.addf %152, %3 : vector<4x256xf32>
    %cst_27 = arith.constant dense<0.000000e+00> : vector<4x256xf32>
    %154 = tpu.matmul %144, %1, %cst_27 {dimension_numbers = #tpu.dot_dimension_numbers<[1], [0], [0], [1], [0, 0, 1, 1], [], []>} : vector<4x64xf32>, vector<64x256xf32>, vector<4x256xf32> -> vector<4x256xf32>
    %155 = arith.addf %153, %154 : vector<4x256xf32>
    %156 = math.tanh %155 : vector<4x256xf32>
    %157 = arith.negf %155 : vector<4x256xf32>
    %158 = math.exp %157 : vector<4x256xf32>
    %cst_28 = arith.constant 1.000000e+00 : f32
    %159 = vector.broadcast %cst_28 : f32 to vector<4x256xf32>
    %160 = arith.addf %159, %158 : vector<4x256xf32>
    %161 = arith.divf %159, %160 : vector<4x256xf32>
    %162 = arith.select %13, %156, %161 : vector<4x256xi1>, vector<4x256xf32>
    %163 = vector.extract_strided_slice %162 {offsets = [0, 0], sizes = [4, 64], strides = [1, 1]} : vector<4x256xf32> to vector<4x64xf32>
    %164 = vector.extract_strided_slice %162 {offsets = [0, 64], sizes = [4, 64], strides = [1, 1]} : vector<4x256xf32> to vector<4x64xf32>
    %165 = vector.extract_strided_slice %162 {offsets = [0, 128], sizes = [4, 64], strides = [1, 1]} : vector<4x256xf32> to vector<4x64xf32>
    %166 = vector.extract_strided_slice %162 {offsets = [0, 192], sizes = [4, 64], strides = [1, 1]} : vector<4x256xf32> to vector<4x64xf32>
    %167 = arith.mulf %164, %142 : vector<4x64xf32>
    %168 = arith.mulf %163, %165 : vector<4x64xf32>
    %169 = arith.addf %167, %168 : vector<4x64xf32>
    %170 = math.tanh %169 : vector<4x64xf32>
    %171 = arith.mulf %166, %170 : vector<4x64xf32>
    %cst_29 = arith.constant 5.000000e+00 : f32
    %172 = vector.broadcast %cst_29 : f32 to vector<4x1xf32>
    %173 = arith.cmpf ogt, %5, %172 : vector<4x1xf32>
    %174 = arith.extui %173 : vector<4x1xi1> to vector<4x1xi32>
    %175 = arith.sitofp %174 : vector<4x1xi32> to vector<4x1xf32>
    %176 = vector.broadcast %175 : vector<4x1xf32> to vector<4x64xf32>
    %177 = arith.mulf %171, %176 : vector<4x64xf32>
    %178 = arith.addf %151, %177 : vector<4x64xf32>
    %179 = vector.extract_strided_slice %7 {offsets = [24, 0], sizes = [4, 256], strides = [1, 1]} : vector<32x256xf32> to vector<4x256xf32>
    %180 = arith.addf %179, %3 : vector<4x256xf32>
    %cst_30 = arith.constant dense<0.000000e+00> : vector<4x256xf32>
    %181 = tpu.matmul %171, %1, %cst_30 {dimension_numbers = #tpu.dot_dimension_numbers<[1], [0], [0], [1], [0, 0, 1, 1], [], []>} : vector<4x64xf32>, vector<64x256xf32>, vector<4x256xf32> -> vector<4x256xf32>
    %182 = arith.addf %180, %181 : vector<4x256xf32>
    %183 = math.tanh %182 : vector<4x256xf32>
    %184 = arith.negf %182 : vector<4x256xf32>
    %185 = math.exp %184 : vector<4x256xf32>
    %cst_31 = arith.constant 1.000000e+00 : f32
    %186 = vector.broadcast %cst_31 : f32 to vector<4x256xf32>
    %187 = arith.addf %186, %185 : vector<4x256xf32>
    %188 = arith.divf %186, %187 : vector<4x256xf32>
    %189 = arith.select %13, %183, %188 : vector<4x256xi1>, vector<4x256xf32>
    %190 = vector.extract_strided_slice %189 {offsets = [0, 0], sizes = [4, 64], strides = [1, 1]} : vector<4x256xf32> to vector<4x64xf32>
    %191 = vector.extract_strided_slice %189 {offsets = [0, 64], sizes = [4, 64], strides = [1, 1]} : vector<4x256xf32> to vector<4x64xf32>
    %192 = vector.extract_strided_slice %189 {offsets = [0, 128], sizes = [4, 64], strides = [1, 1]} : vector<4x256xf32> to vector<4x64xf32>
    %193 = vector.extract_strided_slice %189 {offsets = [0, 192], sizes = [4, 64], strides = [1, 1]} : vector<4x256xf32> to vector<4x64xf32>
    %194 = arith.mulf %191, %169 : vector<4x64xf32>
    %195 = arith.mulf %190, %192 : vector<4x64xf32>
    %196 = arith.addf %194, %195 : vector<4x64xf32>
    %197 = math.tanh %196 : vector<4x64xf32>
    %198 = arith.mulf %193, %197 : vector<4x64xf32>
    %cst_32 = arith.constant 6.000000e+00 : f32
    %199 = vector.broadcast %cst_32 : f32 to vector<4x1xf32>
    %200 = arith.cmpf ogt, %5, %199 : vector<4x1xf32>
    %201 = arith.extui %200 : vector<4x1xi1> to vector<4x1xi32>
    %202 = arith.sitofp %201 : vector<4x1xi32> to vector<4x1xf32>
    %203 = vector.broadcast %202 : vector<4x1xf32> to vector<4x64xf32>
    %204 = arith.mulf %198, %203 : vector<4x64xf32>
    %205 = arith.addf %178, %204 : vector<4x64xf32>
    %206 = vector.extract_strided_slice %7 {offsets = [28, 0], sizes = [4, 256], strides = [1, 1]} : vector<32x256xf32> to vector<4x256xf32>
    %207 = arith.addf %206, %3 : vector<4x256xf32>
    %cst_33 = arith.constant dense<0.000000e+00> : vector<4x256xf32>
    %208 = tpu.matmul %198, %1, %cst_33 {dimension_numbers = #tpu.dot_dimension_numbers<[1], [0], [0], [1], [0, 0, 1, 1], [], []>} : vector<4x64xf32>, vector<64x256xf32>, vector<4x256xf32> -> vector<4x256xf32>
    %209 = arith.addf %207, %208 : vector<4x256xf32>
    %210 = math.tanh %209 : vector<4x256xf32>
    %211 = arith.negf %209 : vector<4x256xf32>
    %212 = math.exp %211 : vector<4x256xf32>
    %cst_34 = arith.constant 1.000000e+00 : f32
    %213 = vector.broadcast %cst_34 : f32 to vector<4x256xf32>
    %214 = arith.addf %213, %212 : vector<4x256xf32>
    %215 = arith.divf %213, %214 : vector<4x256xf32>
    %216 = arith.select %13, %210, %215 : vector<4x256xi1>, vector<4x256xf32>
    %217 = vector.extract_strided_slice %216 {offsets = [0, 0], sizes = [4, 64], strides = [1, 1]} : vector<4x256xf32> to vector<4x64xf32>
    %218 = vector.extract_strided_slice %216 {offsets = [0, 64], sizes = [4, 64], strides = [1, 1]} : vector<4x256xf32> to vector<4x64xf32>
    %219 = vector.extract_strided_slice %216 {offsets = [0, 128], sizes = [4, 64], strides = [1, 1]} : vector<4x256xf32> to vector<4x64xf32>
    %220 = vector.extract_strided_slice %216 {offsets = [0, 192], sizes = [4, 64], strides = [1, 1]} : vector<4x256xf32> to vector<4x64xf32>
    %221 = arith.mulf %218, %196 : vector<4x64xf32>
    %222 = arith.mulf %217, %219 : vector<4x64xf32>
    %223 = arith.addf %221, %222 : vector<4x64xf32>
    %224 = math.tanh %223 : vector<4x64xf32>
    %225 = arith.mulf %220, %224 : vector<4x64xf32>
    %cst_35 = arith.constant 7.000000e+00 : f32
    %226 = vector.broadcast %cst_35 : f32 to vector<4x1xf32>
    %227 = arith.cmpf ogt, %5, %226 : vector<4x1xf32>
    %228 = arith.extui %227 : vector<4x1xi1> to vector<4x1xi32>
    %229 = arith.sitofp %228 : vector<4x1xi32> to vector<4x1xf32>
    %230 = vector.broadcast %229 : vector<4x1xf32> to vector<4x64xf32>
    %231 = arith.mulf %225, %230 : vector<4x64xf32>
    %232 = arith.addf %205, %231 : vector<4x64xf32>
    %233 = vector.extract_strided_slice %232 {offsets = [0, 0], sizes = [2, 64], strides = [1, 1]} : vector<4x64xf32> to vector<2x64xf32>
    %234 = vector.extract_strided_slice %232 {offsets = [2, 0], sizes = [2, 64], strides = [1, 1]} : vector<4x64xf32> to vector<2x64xf32>
    %235 = arith.addf %233, %234 : vector<2x64xf32>
    %cst_36 = arith.constant dense<0.000000e+00> : vector<2x2xf32>
    %236 = tpu.matmul %235, %2, %cst_36 {dimension_numbers = #tpu.dot_dimension_numbers<[1], [0], [0], [1], [0, 0, 1, 1], [], []>} : vector<2x64xf32>, vector<64x2xf32>, vector<2x2xf32> -> vector<2x2xf32>
    %237 = vector.broadcast %4 : vector<1x2xf32> to vector<2x2xf32>
    %238 = arith.addf %236, %237 : vector<2x2xf32>
    %c0_37 = arith.constant 0 : index
    %c0_38 = arith.constant 0 : index
    %239 = vector.load %arg3[%c0_37, %c0_38] : memref<2x2xf32, #tpu.memory_space<vmem>>, vector<2x2xf32>
    tpu.vector_store %arg3[%c0_37, %c0_38], %238 {strides = array<i32>} : memref<2x2xf32, #tpu.memory_space<vmem>>, vector<2x2xf32>,
    return
  }
}

</mosaic_0001>

<llo_original>
// kernel: model_forward.1
$region0: #{model_forward.1}
  #allocation0 [shape = 'u32[]', space=smem, size = 0x4, offset = 0x4, fixed_abs, tag = 'smem constant byte address 0x4 - core index']
  #allocation1 [shape = 'u32[144,128]{1,0:T(1,128)}', space=vmem, size = 0x12000, scoped, tag = 'internal scratch']
  %s0 = inlined_call_operand.vmem [shape: f32[32,64], index: 0, kind: input, shape index: {}]
  %s1 = inlined_call_operand.vmem [shape: f32[192,256], index: 1, kind: input, shape index: {}]
  %s2 = inlined_call_operand.vmem [shape: f32[16,256], index: 2, kind: input, shape index: {}]
  %s3 = inlined_call_operand.hbm [shape: f32[2,2], index: 3, kind: output, shape index: {}]
  %s4 = sld [smem:[#allocation0]]
  $region22: #{model_forward.1} parent=0
    _
  %s6 = ssub.s32 1, %s4
  %s7 = scalar_select 0, %s6, %s4
  $region1: #{model_forward.1} parent=0
    #allocation2 [shape = 'u8[1024]{0}', space=vmem, size = 0x400, scoped, tag = 'output window, operand 0, single buffered']
    #allocation3 [shape = 's32[1]{0}', space=sflag, size = 0x4, scoped, tag = 'scoped memory for model_forward.1']
    %8 = vsyncpa [#allocation3], 0
    // Predicated region
    $region2: #{model_forward.1} parent=1 // pred_check
      _
    $region3: #{model_forward.1} parent=1 // pred_check_branch
      %10 = sbr.rel (0) target = $region5
    $region4: #{model_forward.1} parent=1 // pred_region
      _
    $region5: #{model_forward.1} parent=1 // pred_fallthru
      _
    // Predicated region
    $region6: #{model_forward.1} parent=1 // pred_check
      _
    $region7: #{model_forward.1} parent=1 // pred_check_branch
      %12 = sbr.rel (0) target = $region9
    $region8: #{model_forward.1} parent=1 // pred_region
      _
    $region9: #{model_forward.1} parent=1 // pred_fallthru
      _
    // Predicated region
    $region10: #{model_forward.1} parent=1 // pred_check
      _
    $region11: #{model_forward.1} parent=1 // pred_check_branch
      %14 = sbr.rel (0) target = $region13
    $region12: #{model_forward.1} parent=1 // pred_region
      _
    $region13: #{model_forward.1} parent=1 // pred_fallthru
      _
    %v15 = vld [vmem:[%s1] sm:$0xff]
    %v16 = vld [vmem:[%s1 + $0x8] sm:$0xff]
    %v17 = vld [vmem:[%s1 + $0x10] sm:$0xff]
    %v18 = vld [vmem:[%s1 + $0x18] sm:$0xff]
    %v19 = vld [vmem:[%s1 + $0x20] sm:$0xff]
    %v20 = vld [vmem:[%s1 + $0x28] sm:$0xff]
    %v21 = vld [vmem:[%s1 + $0x30] sm:$0xff]
    %v22 = vld [vmem:[%s1 + $0x38] sm:$0xff]
    %v23 = vld [vmem:[%s1 + $0x40] sm:$0xff]
    %v24 = vld [vmem:[%s1 + $0x48] sm:$0xff]
    %v25 = vld [vmem:[%s1 + $0x50] sm:$0xff]
    %v26 = vld [vmem:[%s1 + $0x58] sm:$0xff]
    %v27 = vld [vmem:[%s1 + $0x60] sm:$0xff]
    %v28 = vld [vmem:[%s1 + $0x68] sm:$0xff]
    %v29 = vld [vmem:[%s1 + $0x70] sm:$0xff]
    %v30 = vld [vmem:[%s1 + $0x78] sm:$0xff]
    %v31 = vld [vmem:[%s1 + $0x80] sm:$0xff]
    %v32 = vld [vmem:[%s1 + $0x88] sm:$0xff]
    %v33 = vld [vmem:[%s1 + $0x90] sm:$0xff]
    %v34 = vld [vmem:[%s1 + $0x98] sm:$0xff]
    %v35 = vld [vmem:[%s1 + $0xa0] sm:$0xff]
    %v36 = vld [vmem:[%s1 + $0xa8] sm:$0xff]
    %v37 = vld [vmem:[%s1 + $0xb0] sm:$0xff]
    %v38 = vld [vmem:[%s1 + $0xb8] sm:$0xff]
    %v39 = vld [vmem:[%s1 + $0xc0] sm:$0xff]
    %v40 = vld [vmem:[%s1 + $0xc8] sm:$0xff]
    %v41 = vld [vmem:[%s1 + $0xd0] sm:$0xff]
    %v42 = vld [vmem:[%s1 + $0xd8] sm:$0xff]
    %v43 = vld [vmem:[%s1 + $0xe0] sm:$0xff]
    %v44 = vld [vmem:[%s1 + $0xe8] sm:$0xff]
    %v45 = vld [vmem:[%s1 + $0xf0] sm:$0xff]
    %v46 = vld [vmem:[%s1 + $0xf8] sm:$0xff]
    %v47 = vld [vmem:[%s1 + $0x100] sm:$0xff]
    %v48 = vld [vmem:[%s1 + $0x110] sm:$0xff]
    %v49 = vld [vmem:[%s1 + $0x120] sm:$0xff]
    %v50 = vld [vmem:[%s1 + $0x130] sm:$0xff]
    %v51 = vld [vmem:[%s1 + $0x140] sm:$0xff]
    %v52 = vld [vmem:[%s1 + $0x150] sm:$0xff]
    %v53 = vld [vmem:[%s1 + $0x160] sm:$0xff]
    %v54 = vld [vmem:[%s1 + $0x170] sm:$0xff]
    %v55 = vld [vmem:[%s2] sm:$0xf]
    %v56 = vld [vmem:[%s2 + $0x8] sm:$0xf]
    %v57 = vld [vmem:[%s2 + $0x4] ss:$0 sm:$0xff]
    %v58 = vld [vmem:[%s2 + $0x10] sm:$0xf]
    %v59 = vld [vmem:[%s0] sm:$0xff]
    %v60 = vld [vmem:[%s0 + $0x8] sm:$0xff]
    %v61 = vld [vmem:[%s0 + $0x10] sm:$0xff]
    %v62 = vld [vmem:[%s0 + $0x18] sm:$0xff]
    %vm63 = vcmask 523264
    %v65 = vsel %vm63, %v59, 0
    %v68 = vsel %vm63, %v60, 0
    %v71 = vsel %vm63, %v61, 0
    %v74 = vsel %vm63, %v62, 0
    %76 = vmatprep.subr.mxu0 %v16
    %77 = vmatpush1.msra.mxu0 %v15
    %78 = vmatprep.subr.mxu0 %v18
    %79 = vmatpush1.msra.mxu0 %v17
    %80 = vmatprep.subr.mxu0 %v20
    %81 = vmatpush1.msra.mxu0 %v19
    %82 = vmatprep.subr.mxu0 %v22
    %83 = vmatpush1.msra.mxu0 %v21
    %84 = vmatprep.subr.mxu0 %v24
    %85 = vmatpush1.msra.mxu0 %v23
    %86 = vmatprep.subr.mxu0 %v26
    %87 = vmatpush1.msra.mxu0 %v25
    %88 = vmatprep.subr.mxu0 %v28
    %89 = vmatpush1.msra.mxu0 %v27
    %90 = vmatprep.subr.mxu0 %v30
    %91 = vmatpush1.msra.mxu0 %v29
    %92 = vmatprep.subr.mxu0 0.0
    %93 = vmatpush1.msra.mxu0 0.0
    %94 = vmatprep.subr.mxu0 0.0
    %95 = vmatpush1.msra.mxu0 0.0
    %96 = vmatprep.subr.mxu0 0.0
    %97 = vmatpush1.msra.mxu0 0.0
    %98 = vmatprep.subr.mxu0 0.0
    %99 = vmatpush1.msra.mxu0 0.0
    %100 = vmatprep.subr.mxu0 0.0
    %101 = vmatpush1.msra.mxu0 0.0
    %102 = vmatprep.subr.mxu0 0.0
    %103 = vmatpush1.msra.mxu0 0.0
    %104 = vmatprep.subr.mxu0 0.0
    %105 = vmatpush1.msra.mxu0 0.0
    %106 = vmatprep.subr.mxu0 0.0
    %107 = vmatpush1.msra.mxu0 0.0
    %108 = vmatprep.subr.mxu0 0.0
    %109 = vmatpush1.msra.mxu0 0.0
    %110 = vmatprep.subr.mxu0 0.0
    %111 = vmatpush1.msra.mxu0 0.0
    %112 = vmatprep.subr.mxu0 0.0
    %113 = vmatpush1.msra.mxu0 0.0
    %114 = vmatprep.subr.mxu0 0.0
    %115 = vmatpush1.msra.mxu0 0.0
    %116 = vmatprep.subr.mxu0 0.0
    %117 = vmatpush1.msra.mxu0 0.0
    %118 = vmatprep.subr.mxu0 0.0
    %119 = vmatpush1.msra.mxu0 0.0
    %120 = vmatprep.subr.mxu0 0.0
    %121 = vmatpush1.msra.mxu0 0.0
    %122 = vmatprep.subr.mxu0 0.0
    %123 = vmatpush1.msra.mxu0 0.0
    %124 = vmatprep.subr.mxu0 0.0
    %125 = vmatpush1.msra.mxu0 0.0
    %126 = vmatprep.subr.mxu0 0.0
    %127 = vmatpush1.msra.mxu0 0.0
    %128 = vmatprep.subr.mxu0 0.0
    %129 = vmatpush1.msra.mxu0 0.0
    %130 = vmatprep.subr.mxu0 0.0
    %131 = vmatpush1.msra.mxu0 0.0
    %132 = vmatprep.subr.mxu0 0.0
    %133 = vmatpush1.msra.mxu0 0.0
    %134 = vmatprep.subr.mxu0 0.0
    %135 = vmatpush1.msra.mxu0 0.0
    %136 = vmatprep.subr.mxu0 0.0
    %137 = vmatpush1.msra.mxu0 0.0
    %138 = vmatprep.subr.mxu0 0.0
    %139 = vmatpush1.msra.mxu0 0.0
    %140 = vmatprep.mubr.f32.mxu0 0.0
    %141 = vmatmul.mubr.f32.gmra.mrb[0].mxu0 %v65
    %v142 = vpop.f32.mrb[0].mxu0
    %v143 = vadd.f32 0.0, %v142
    %v144 = vpop.f32.mrb[0].mxu0
    %v145 = vadd.f32 0.0, %v144
    %146 = vmatprep.mubr.f32.mxu0 0.0
    %147 = vmatmul.mubr.f32.gmra.mrb[0].mxu0 %v68
    %v148 = vpop.f32.mrb[0].mxu0
    %v149 = vadd.f32 0.0, %v148
    %v150 = vpop.f32.mrb[0].mxu0
    %v151 = vadd.f32 0.0, %v150
    %152 = vmatprep.mubr.f32.mxu0 0.0
    %153 = vmatmul.mubr.f32.gmra.mrb[0].mxu0 %v71
    %v154 = vpop.f32.mrb[0].mxu0
    %v155 = vadd.f32 0.0, %v154
    %v156 = vpop.f32.mrb[0].mxu0
    %v157 = vadd.f32 0.0, %v156
    %158 = vmatprep.mubr.f32.mxu0 0.0
    %159 = vmatmul.mubr.f32.gmra.mrb[0].mxu0 %v74
    %v160 = vpop.f32.mrb[0].mxu0
    %v161 = vadd.f32 0.0, %v160
    %v162 = vpop.f32.mrb[0].mxu0
    %v163 = vadd.f32 0.0, %v162
    %164 = vdwg.mxu0
    %v165 = vlaneseq
    %v166 = vand.u32 %v165, 127
    %v167 = vadd.s32 %v166, 128
    %vm168 = vcmp.ge.s32.totalorder %v166, 128
    %vm169 = vcmp.ge.s32.totalorder %v167, 128
    %vm170 = vcmp.lt.s32.totalorder %v166, 192
    %vm171 = vcmp.lt.s32.totalorder %v167, 192
    %vm172 = vmand %vm168, %vm170
    %vm173 = vmand %vm169, %vm171
    %v174 = vadd.f32 %v143, %v55
    %v175 = vadd.f32 %v145, %v56
    %v177 = vsel %vm63, 0.0, 0
    %179 = vmatprep.subr.mxu0 %v32
    %180 = vmatpush1.msra.mxu0 %v31
    %181 = vmatprep.subr.mxu0 %v34
    %182 = vmatpush1.msra.mxu0 %v33
    %183 = vmatprep.subr.mxu0 %v36
    %184 = vmatpush1.msra.mxu0 %v35
    %185 = vmatprep.subr.mxu0 %v38
    %186 = vmatpush1.msra.mxu0 %v37
    %187 = vmatprep.subr.mxu0 %v40
    %188 = vmatpush1.msra.mxu0 %v39
    %189 = vmatprep.subr.mxu0 %v42
    %190 = vmatpush1.msra.mxu0 %v41
    %191 = vmatprep.subr.mxu0 %v44
    %192 = vmatpush1.msra.mxu0 %v43
    %193 = vmatprep.subr.mxu0 %v46
    %194 = vmatpush1.msra.mxu0 %v45
    %195 = vmatprep.subr.mxu0 0.0
    %196 = vmatpush1.msra.mxu0 0.0
    %197 = vmatprep.subr.mxu0 0.0
    %198 = vmatpush1.msra.mxu0 0.0
    %199 = vmatprep.subr.mxu0 0.0
    %200 = vmatpush1.msra.mxu0 0.0
    %201 = vmatprep.subr.mxu0 0.0
    %202 = vmatpush1.msra.mxu0 0.0
    %203 = vmatprep.subr.mxu0 0.0
    %204 = vmatpush1.msra.mxu0 0.0
    %205 = vmatprep.subr.mxu0 0.0
    %206 = vmatpush1.msra.mxu0 0.0
    %207 = vmatprep.subr.mxu0 0.0
    %208 = vmatpush1.msra.mxu0 0.0
    %209 = vmatprep.subr.mxu0 0.0
    %210 = vmatpush1.msra.mxu0 0.0
    %211 = vmatprep.subr.mxu0 0.0
    %212 = vmatpush1.msra.mxu0 0.0
    %213 = vmatprep.subr.mxu0 0.0
    %214 = vmatpush1.msra.mxu0 0.0
    %215 = vmatprep.subr.mxu0 0.0
    %216 = vmatpush1.msra.mxu0 0.0
    %217 = vmatprep.subr.mxu0 0.0
    %218 = vmatpush1.msra.mxu0 0.0
    %219 = vmatprep.subr.mxu0 0.0
    %220 = vmatpush1.msra.mxu0 0.0
    %221 = vmatprep.subr.mxu0 0.0
    %222 = vmatpush1.msra.mxu0 0.0
    %223 = vmatprep.subr.mxu0 0.0
    %224 = vmatpush1.msra.mxu0 0.0
    %225 = vmatprep.subr.mxu0 0.0
    %226 = vmatpush1.msra.mxu0 0.0
    %227 = vmatprep.subr.mxu0 0.0
    %228 = vmatpush1.msra.mxu0 0.0
    %229 = vmatprep.subr.mxu0 0.0
    %230 = vmatpush1.msra.mxu0 0.0
    %231 = vmatprep.subr.mxu0 0.0
    %232 = vmatpush1.msra.mxu0 0.0
    %233 = vmatprep.subr.mxu0 0.0
    %234 = vmatpush1.msra.mxu0 0.0
    %235 = vmatprep.subr.mxu0 0.0
    %236 = vmatpush1.msra.mxu0 0.0
    %237 = vmatprep.subr.mxu0 0.0
    %238 = vmatpush1.msra.mxu0 0.0
    %239 = vmatprep.subr.mxu0 0.0
    %240 = vmatpush1.msra.mxu0 0.0
    %241 = vmatprep.subr.mxu0 0.0
    %242 = vmatpush1.msra.mxu0 0.0
    %243 = vmatprep.mubr.f32.mxu0 0.0
    %244 = vmatmul.mubr.f32.gmra.mrb[0].mxu0 %v177
    %v245 = vpop.f32.mrb[0].mxu0
    %v246 = vadd.f32 0.0, %v245
    %v247 = vpop.f32.mrb[0].mxu0
    %v248 = vadd.f32 0.0, %v247
    %249 = vdwg.mxu0
    %v250 = vadd.f32 %v174, %v246
    %v251 = vadd.f32 %v175, %v248
    %v252 = vtanh.pop %v250
    %v253 = vtanh.pop %v251
    %v254 = vxor.u32 %v250, 2147483648
    %v255 = vxor.u32 %v251, 2147483648
    %v256 = vmul.f32 %v254, 1.442695
    %v257 = vpow.pop %v256
    %v258 = vmul.f32 %v255, 1.442695
    %v259 = vpow.pop %v258
    %v260 = vadd.f32 %v257, 1.0
    %v261 = vadd.f32 %v259, 1.0
    %v262 = vrcp.pop %v260
    %v263 = vmul.f32 1.0, %v262
    %v264 = vrcp.pop %v261
    %v265 = vmul.f32 1.0, %v264
    %v266 = vsel %vm172, %v252, %v263
    %v267 = vsel %vm173, %v253, %v265
    %v268 = vmul.f32 %v266, 0.0
    %v269 = vmul.f32 %v266, %v267
    %271 = vrot.lane.b32.xlu0 %v269, 64
    %v272 = vpop.permute.xlu0 %271
    %v274 = vadd.f32 %v268, %v272
    %v275 = vtanh.pop %v274
    %v276 = vmul.f32 %v267, %v275
    %vm277 = vcmp.gt.f32.partialorder %v58, 0.0
    %v278 = vsel %vm277, 1, 0
    %v279 = vcvt.s32.f32 %v278
    %281 = vset.pattern.permute.xlu0 0
    %282 = vperm.xlu0 %281, %v279
    %v283 = vpop.permute.xlu0 %282
    %v285 = vmul.f32 %v276, %v283
    %v286 = vadd.f32 %v285, 0.0
    %v289 = vrot.slane %v55, 4
    %v290 = vrot.slane %v56, 4
    %v293 = vadd.f32 %v143, %v289
    %v294 = vadd.f32 %v145, %v290
    %296 = vrot.lane.b32.xlu0 %v276, 64
    %v297 = vpop.permute.xlu0 %296
    %v298 = vsel %vm63, %v297, 0
    %300 = vmatprep.subr.mxu0 %v32
    %301 = vmatpush1.msra.mxu0 %v31
    %302 = vmatprep.subr.mxu0 %v34
    %303 = vmatpush1.msra.mxu0 %v33
    %304 = vmatprep.subr.mxu0 %v36
    %305 = vmatpush1.msra.mxu0 %v35
    %306 = vmatprep.subr.mxu0 %v38
    %307 = vmatpush1.msra.mxu0 %v37
    %308 = vmatprep.subr.mxu0 %v40
    %309 = vmatpush1.msra.mxu0 %v39
    %310 = vmatprep.subr.mxu0 %v42
    %311 = vmatpush1.msra.mxu0 %v41
    %312 = vmatprep.subr.mxu0 %v44
    %313 = vmatpush1.msra.mxu0 %v43
    %314 = vmatprep.subr.mxu0 %v46
    %315 = vmatpush1.msra.mxu0 %v45
    %316 = vmatprep.subr.mxu0 0.0
    %317 = vmatpush1.msra.mxu0 0.0
    %318 = vmatprep.subr.mxu0 0.0
    %319 = vmatpush1.msra.mxu0 0.0
    %320 = vmatprep.subr.mxu0 0.0
    %321 = vmatpush1.msra.mxu0 0.0
    %322 = vmatprep.subr.mxu0 0.0
    %323 = vmatpush1.msra.mxu0 0.0
    %324 = vmatprep.subr.mxu0 0.0
    %325 = vmatpush1.msra.mxu0 0.0
    %326 = vmatprep.subr.mxu0 0.0
    %327 = vmatpush1.msra.mxu0 0.0
    %328 = vmatprep.subr.mxu0 0.0
    %329 = vmatpush1.msra.mxu0 0.0
    %330 = vmatprep.subr.mxu0 0.0
    %331 = vmatpush1.msra.mxu0 0.0
    %332 = vmatprep.subr.mxu0 0.0
    %333 = vmatpush1.msra.mxu0 0.0
    %334 = vmatprep.subr.mxu0 0.0
    %335 = vmatpush1.msra.mxu0 0.0
    %336 = vmatprep.subr.mxu0 0.0
    %337 = vmatpush1.msra.mxu0 0.0
    %338 = vmatprep.subr.mxu0 0.0
    %339 = vmatpush1.msra.mxu0 0.0
    %340 = vmatprep.subr.mxu0 0.0
    %341 = vmatpush1.msra.mxu0 0.0
    %342 = vmatprep.subr.mxu0 0.0
    %343 = vmatpush1.msra.mxu0 0.0
    %344 = vmatprep.subr.mxu0 0.0
    %345 = vmatpush1.msra.mxu0 0.0
    %346 = vmatprep.subr.mxu0 0.0
    %347 = vmatpush1.msra.mxu0 0.0
    %348 = vmatprep.subr.mxu0 0.0
    %349 = vmatpush1.msra.mxu0 0.0
    %350 = vmatprep.subr.mxu0 0.0
    %351 = vmatpush1.msra.mxu0 0.0
    %352 = vmatprep.subr.mxu0 0.0
    %353 = vmatpush1.msra.mxu0 0.0
    %354 = vmatprep.subr.mxu0 0.0
    %355 = vmatpush1.msra.mxu0 0.0
    %356 = vmatprep.subr.mxu0 0.0
    %357 = vmatpush1.msra.mxu0 0.0
    %358 = vmatprep.subr.mxu0 0.0
    %359 = vmatpush1.msra.mxu0 0.0
    %360 = vmatprep.subr.mxu0 0.0
    %361 = vmatpush1.msra.mxu0 0.0
    %362 = vmatprep.subr.mxu0 0.0
    %363 = vmatpush1.msra.mxu0 0.0
    %364 = vmatprep.mubr.f32.mxu0 0.0
    %365 = vmatmul.mubr.f32.gmra.mrb[0].mxu0 %v298
    %v366 = vpop.f32.mrb[0].mxu0
    %v367 = vadd.f32 0.0, %v366
    %v368 = vpop.f32.mrb[0].mxu0
    %v369 = vadd.f32 0.0, %v368
    %370 = vdwg.mxu0
    %v373 = vrot.slane %v367, 4
    %v374 = vrot.slane %v369, 4
    %v377 = vadd.f32 %v293, %v373
    %v378 = vadd.f32 %v294, %v374
    %v379 = vtanh.pop %v377
    %v380 = vtanh.pop %v378
    %v381 = vxor.u32 %v377, 2147483648
    %v382 = vxor.u32 %v378, 2147483648
    %v383 = vmul.f32 %v381, 1.442695
    %v384 = vpow.pop %v383
    %v385 = vmul.f32 %v382, 1.442695
    %v386 = vpow.pop %v385
    %v387 = vadd.f32 %v384, 1.0
    %v388 = vadd.f32 %v386, 1.0
    %v389 = vrcp.pop %v387
    %v390 = vmul.f32 1.0, %v389
    %v391 = vrcp.pop %v388
    %v392 = vmul.f32 1.0, %v391
    %v393 = vsel %vm172, %v379, %v390
    %v394 = vsel %vm173, %v380, %v392
    %v396 = vrot.slane %v274, 4
    %v398 = vmul.f32 %v393, %v396
    %v399 = vmul.f32 %v393, %v394
    %401 = vrot.lane.b32.xlu0 %v399, 64
    %v402 = vpop.permute.xlu0 %401
    %v404 = vadd.f32 %v398, %v402
    %v405 = vtanh.pop %v404
    %v406 = vmul.f32 %v394, %v405
    %vm407 = vcmp.gt.f32.partialorder %v58, 1.0
    %v408 = vsel %vm407, 1, 0
    %v409 = vcvt.s32.f32 %v408
    %411 = vset.pattern.permute.xlu0 0
    %412 = vperm.xlu0 %411, %v409
    %v413 = vpop.permute.xlu0 %412
    %v414 = vrot.slane %v413, 4
    %v416 = vmul.f32 %v406, %v414
    %v418 = vrot.slane %v416, 4
    %v420 = vadd.f32 %v286, %v418
    %v421 = vadd.f32 %v149, %v55
    %v422 = vadd.f32 %v151, %v56
    %v424 = vrot.slane %v406, 4
    %425 = vrot.lane.b32.xlu0 %v424, 64
    %v426 = vpop.permute.xlu0 %425
    %v427 = vsel %vm63, %v426, 0
    %429 = vmatprep.subr.mxu0 %v32
    %430 = vmatpush1.msra.mxu0 %v31
    %431 = vmatprep.subr.mxu0 %v34
    %432 = vmatpush1.msra.mxu0 %v33
    %433 = vmatprep.subr.mxu0 %v36
    %434 = vmatpush1.msra.mxu0 %v35
    %435 = vmatprep.subr.mxu0 %v38
    %436 = vmatpush1.msra.mxu0 %v37
    %437 = vmatprep.subr.mxu0 %v40
    %438 = vmatpush1.msra.mxu0 %v39
    %439 = vmatprep.subr.mxu0 %v42
    %440 = vmatpush1.msra.mxu0 %v41
    %441 = vmatprep.subr.mxu0 %v44
    %442 = vmatpush1.msra.mxu0 %v43
    %443 = vmatprep.subr.mxu0 %v46
    %444 = vmatpush1.msra.mxu0 %v45
    %445 = vmatprep.subr.mxu0 0.0
    %446 = vmatpush1.msra.mxu0 0.0
    %447 = vmatprep.subr.mxu0 0.0
    %448 = vmatpush1.msra.mxu0 0.0
    %449 = vmatprep.subr.mxu0 0.0
    %450 = vmatpush1.msra.mxu0 0.0
    %451 = vmatprep.subr.mxu0 0.0
    %452 = vmatpush1.msra.mxu0 0.0
    %453 = vmatprep.subr.mxu0 0.0
    %454 = vmatpush1.msra.mxu0 0.0
    %455 = vmatprep.subr.mxu0 0.0
    %456 = vmatpush1.msra.mxu0 0.0
    %457 = vmatprep.subr.mxu0 0.0
    %458 = vmatpush1.msra.mxu0 0.0
    %459 = vmatprep.subr.mxu0 0.0
    %460 = vmatpush1.msra.mxu0 0.0
    %461 = vmatprep.subr.mxu0 0.0
    %462 = vmatpush1.msra.mxu0 0.0
    %463 = vmatprep.subr.mxu0 0.0
    %464 = vmatpush1.msra.mxu0 0.0
    %465 = vmatprep.subr.mxu0 0.0
    %466 = vmatpush1.msra.mxu0 0.0
    %467 = vmatprep.subr.mxu0 0.0
    %468 = vmatpush1.msra.mxu0 0.0
    %469 = vmatprep.subr.mxu0 0.0
    %470 = vmatpush1.msra.mxu0 0.0
    %471 = vmatprep.subr.mxu0 0.0
    %472 = vmatpush1.msra.mxu0 0.0
    %473 = vmatprep.subr.mxu0 0.0
    %474 = vmatpush1.msra.mxu0 0.0
    %475 = vmatprep.subr.mxu0 0.0
    %476 = vmatpush1.msra.mxu0 0.0
    %477 = vmatprep.subr.mxu0 0.0
    %478 = vmatpush1.msra.mxu0 0.0
    %479 = vmatprep.subr.mxu0 0.0
    %480 = vmatpush1.msra.mxu0 0.0
    %481 = vmatprep.subr.mxu0 0.0
    %482 = vmatpush1.msra.mxu0 0.0
    %483 = vmatprep.subr.mxu0 0.0
    %484 = vmatpush1.msra.mxu0 0.0
    %485 = vmatprep.subr.mxu0 0.0
    %486 = vmatpush1.msra.mxu0 0.0
    %487 = vmatprep.subr.mxu0 0.0
    %488 = vmatpush1.msra.mxu0 0.0
    %489 = vmatprep.subr.mxu0 0.0
    %490 = vmatpush1.msra.mxu0 0.0
    %491 = vmatprep.subr.mxu0 0.0
    %492 = vmatpush1.msra.mxu0 0.0
    %493 = vmatprep.mubr.f32.mxu0 0.0
    %494 = vmatmul.mubr.f32.gmra.mrb[0].mxu0 %v427
    %v495 = vpop.f32.mrb[0].mxu0
    %v496 = vadd.f32 0.0, %v495
    %v497 = vpop.f32.mrb[0].mxu0
    %v498 = vadd.f32 0.0, %v497
    %499 = vdwg.mxu0
    %v500 = vadd.f32 %v421, %v496
    %v501 = vadd.f32 %v422, %v498
    %v502 = vtanh.pop %v500
    %v503 = vtanh.pop %v501
    %v504 = vxor.u32 %v500, 2147483648
    %v505 = vxor.u32 %v501, 2147483648
    %v506 = vmul.f32 %v504, 1.442695
    %v507 = vpow.pop %v506
    %v508 = vmul.f32 %v505, 1.442695
    %v509 = vpow.pop %v508
    %v510 = vadd.f32 %v507, 1.0
    %v511 = vadd.f32 %v509, 1.0
    %v512 = vrcp.pop %v510
    %v513 = vmul.f32 1.0, %v512
    %v514 = vrcp.pop %v511
    %v515 = vmul.f32 1.0, %v514
    %v516 = vsel %vm172, %v502, %v513
    %v517 = vsel %vm173, %v503, %v515
    %v519 = vrot.slane %v404, 4
    %v521 = vmul.f32 %v516, %v519
    %v522 = vmul.f32 %v516, %v517
    %524 = vrot.lane.b32.xlu0 %v522, 64
    %v525 = vpop.permute.xlu0 %524
    %v527 = vadd.f32 %v521, %v525
    %v528 = vtanh.pop %v527
    %v529 = vmul.f32 %v517, %v528
    %vm530 = vcmp.gt.f32.partialorder %v58, 2.0
    %v531 = vsel %vm530, 1, 0
    %v532 = vcvt.s32.f32 %v531
    %534 = vset.pattern.permute.xlu0 0
    %535 = vperm.xlu0 %534, %v532
    %v536 = vpop.permute.xlu0 %535
    %v538 = vmul.f32 %v529, %v536
    %v539 = vadd.f32 %v420, %v538
    %v540 = vadd.f32 %v149, %v289
    %v541 = vadd.f32 %v151, %v290
    %543 = vrot.lane.b32.xlu0 %v529, 64
    %v544 = vpop.permute.xlu0 %543
    %v545 = vsel %vm63, %v544, 0
    %547 = vmatprep.subr.mxu0 %v32
    %548 = vmatpush1.msra.mxu0 %v31
    %549 = vmatprep.subr.mxu0 %v34
    %550 = vmatpush1.msra.mxu0 %v33
    %551 = vmatprep.subr.mxu0 %v36
    %552 = vmatpush1.msra.mxu0 %v35
    %553 = vmatprep.subr.mxu0 %v38
    %554 = vmatpush1.msra.mxu0 %v37
    %555 = vmatprep.subr.mxu0 %v40
    %556 = vmatpush1.msra.mxu0 %v39
    %557 = vmatprep.subr.mxu0 %v42
    %558 = vmatpush1.msra.mxu0 %v41
    %559 = vmatprep.subr.mxu0 %v44
    %560 = vmatpush1.msra.mxu0 %v43
    %561 = vmatprep.subr.mxu0 %v46
    %562 = vmatpush1.msra.mxu0 %v45
    %563 = vmatprep.subr.mxu0 0.0
    %564 = vmatpush1.msra.mxu0 0.0
    %565 = vmatprep.subr.mxu0 0.0
    %566 = vmatpush1.msra.mxu0 0.0
    %567 = vmatprep.subr.mxu0 0.0
    %568 = vmatpush1.msra.mxu0 0.0
    %569 = vmatprep.subr.mxu0 0.0
    %570 = vmatpush1.msra.mxu0 0.0
    %571 = vmatprep.subr.mxu0 0.0
    %572 = vmatpush1.msra.mxu0 0.0
    %573 = vmatprep.subr.mxu0 0.0
    %574 = vmatpush1.msra.mxu0 0.0
    %575 = vmatprep.subr.mxu0 0.0
    %576 = vmatpush1.msra.mxu0 0.0
    %577 = vmatprep.subr.mxu0 0.0
    %578 = vmatpush1.msra.mxu0 0.0
    %579 = vmatprep.subr.mxu0 0.0
    %580 = vmatpush1.msra.mxu0 0.0
    %581 = vmatprep.subr.mxu0 0.0
    %582 = vmatpush1.msra.mxu0 0.0
    %583 = vmatprep.subr.mxu0 0.0
    %584 = vmatpush1.msra.mxu0 0.0
    %585 = vmatprep.subr.mxu0 0.0
    %586 = vmatpush1.msra.mxu0 0.0
    %587 = vmatprep.subr.mxu0 0.0
    %588 = vmatpush1.msra.mxu0 0.0
    %589 = vmatprep.subr.mxu0 0.0
    %590 = vmatpush1.msra.mxu0 0.0
    %591 = vmatprep.subr.mxu0 0.0
    %592 = vmatpush1.msra.mxu0 0.0
    %593 = vmatprep.subr.mxu0 0.0
    %594 = vmatpush1.msra.mxu0 0.0
    %595 = vmatprep.subr.mxu0 0.0
    %596 = vmatpush1.msra.mxu0 0.0
    %597 = vmatprep.subr.mxu0 0.0
    %598 = vmatpush1.msra.mxu0 0.0
    %599 = vmatprep.subr.mxu0 0.0
    %600 = vmatpush1.msra.mxu0 0.0
    %601 = vmatprep.subr.mxu0 0.0
    %602 = vmatpush1.msra.mxu0 0.0
    %603 = vmatprep.subr.mxu0 0.0
    %604 = vmatpush1.msra.mxu0 0.0
    %605 = vmatprep.subr.mxu0 0.0
    %606 = vmatpush1.msra.mxu0 0.0
    %607 = vmatprep.subr.mxu0 0.0
    %608 = vmatpush1.msra.mxu0 0.0
    %609 = vmatprep.subr.mxu0 0.0
    %610 = vmatpush1.msra.mxu0 0.0
    %611 = vmatprep.mubr.f32.mxu0 0.0
    %612 = vmatmul.mubr.f32.gmra.mrb[0].mxu0 %v545
    %v613 = vpop.f32.mrb[0].mxu0
    %v614 = vadd.f32 0.0, %v613
    %v615 = vpop.f32.mrb[0].mxu0
    %v616 = vadd.f32 0.0, %v615
    %617 = vdwg.mxu0
    %v620 = vrot.slane %v614, 4
    %v621 = vrot.slane %v616, 4
    %v624 = vadd.f32 %v540, %v620
    %v625 = vadd.f32 %v541, %v621
    %v626 = vtanh.pop %v624
    %v627 = vtanh.pop %v625
    %v628 = vxor.u32 %v624, 2147483648
    %v629 = vxor.u32 %v625, 2147483648
    %v630 = vmul.f32 %v628, 1.442695
    %v631 = vpow.pop %v630
    %v632 = vmul.f32 %v629, 1.442695
    %v633 = vpow.pop %v632
    %v634 = vadd.f32 %v631, 1.0
    %v635 = vadd.f32 %v633, 1.0
    %v636 = vrcp.pop %v634
    %v637 = vmul.f32 1.0, %v636
    %v638 = vrcp.pop %v635
    %v639 = vmul.f32 1.0, %v638
    %v640 = vsel %vm172, %v626, %v637
    %v641 = vsel %vm173, %v627, %v639
    %v643 = vrot.slane %v527, 4
    %v645 = vmul.f32 %v640, %v643
    %v646 = vmul.f32 %v640, %v641
    %648 = vrot.lane.b32.xlu0 %v646, 64
    %v649 = vpop.permute.xlu0 %648
    %v651 = vadd.f32 %v645, %v649
    %v652 = vtanh.pop %v651
    %v653 = vmul.f32 %v641, %v652
    %vm654 = vcmp.gt.f32.partialorder %v58, 3.0
    %v655 = vsel %vm654, 1, 0
    %v656 = vcvt.s32.f32 %v655
    %658 = vset.pattern.permute.xlu0 0
    %659 = vperm.xlu0 %658, %v656
    %v660 = vpop.permute.xlu0 %659
    %v661 = vrot.slane %v660, 4
    %v663 = vmul.f32 %v653, %v661
    %v665 = vrot.slane %v663, 4
    %v667 = vadd.f32 %v539, %v665
    %v668 = vadd.f32 %v155, %v55
    %v669 = vadd.f32 %v157, %v56
    %v671 = vrot.slane %v653, 4
    %672 = vrot.lane.b32.xlu0 %v671, 64
    %v673 = vpop.permute.xlu0 %672
    %v674 = vsel %vm63, %v673, 0
    %676 = vmatprep.subr.mxu0 %v32
    %677 = vmatpush1.msra.mxu0 %v31
    %678 = vmatprep.subr.mxu0 %v34
    %679 = vmatpush1.msra.mxu0 %v33
    %680 = vmatprep.subr.mxu0 %v36
    %681 = vmatpush1.msra.mxu0 %v35
    %682 = vmatprep.subr.mxu0 %v38
    %683 = vmatpush1.msra.mxu0 %v37
    %684 = vmatprep.subr.mxu0 %v40
    %685 = vmatpush1.msra.mxu0 %v39
    %686 = vmatprep.subr.mxu0 %v42
    %687 = vmatpush1.msra.mxu0 %v41
    %688 = vmatprep.subr.mxu0 %v44
    %689 = vmatpush1.msra.mxu0 %v43
    %690 = vmatprep.subr.mxu0 %v46
    %691 = vmatpush1.msra.mxu0 %v45
    %692 = vmatprep.subr.mxu0 0.0
    %693 = vmatpush1.msra.mxu0 0.0
    %694 = vmatprep.subr.mxu0 0.0
    %695 = vmatpush1.msra.mxu0 0.0
    %696 = vmatprep.subr.mxu0 0.0
    %697 = vmatpush1.msra.mxu0 0.0
    %698 = vmatprep.subr.mxu0 0.0
    %699 = vmatpush1.msra.mxu0 0.0
    %700 = vmatprep.subr.mxu0 0.0
    %701 = vmatpush1.msra.mxu0 0.0
    %702 = vmatprep.subr.mxu0 0.0
    %703 = vmatpush1.msra.mxu0 0.0
    %704 = vmatprep.subr.mxu0 0.0
    %705 = vmatpush1.msra.mxu0 0.0
    %706 = vmatprep.subr.mxu0 0.0
    %707 = vmatpush1.msra.mxu0 0.0
    %708 = vmatprep.subr.mxu0 0.0
    %709 = vmatpush1.msra.mxu0 0.0
    %710 = vmatprep.subr.mxu0 0.0
    %711 = vmatpush1.msra.mxu0 0.0
    %712 = vmatprep.subr.mxu0 0.0
    %713 = vmatpush1.msra.mxu0 0.0
    %714 = vmatprep.subr.mxu0 0.0
    %715 = vmatpush1.msra.mxu0 0.0
    %716 = vmatprep.subr.mxu0 0.0
    %717 = vmatpush1.msra.mxu0 0.0
    %718 = vmatprep.subr.mxu0 0.0
    %719 = vmatpush1.msra.mxu0 0.0
    %720 = vmatprep.subr.mxu0 0.0
    %721 = vmatpush1.msra.mxu0 0.0
    %722 = vmatprep.subr.mxu0 0.0
    %723 = vmatpush1.msra.mxu0 0.0
    %724 = vmatprep.subr.mxu0 0.0
    %725 = vmatpush1.msra.mxu0 0.0
    %726 = vmatprep.subr.mxu0 0.0
    %727 = vmatpush1.msra.mxu0 0.0
    %728 = vmatprep.subr.mxu0 0.0
    %729 = vmatpush1.msra.mxu0 0.0
    %730 = vmatprep.subr.mxu0 0.0
    %731 = vmatpush1.msra.mxu0 0.0
    %732 = vmatprep.subr.mxu0 0.0
    %733 = vmatpush1.msra.mxu0 0.0
    %734 = vmatprep.subr.mxu0 0.0
    %735 = vmatpush1.msra.mxu0 0.0
    %736 = vmatprep.subr.mxu0 0.0
    %737 = vmatpush1.msra.mxu0 0.0
    %738 = vmatprep.subr.mxu0 0.0
    %739 = vmatpush1.msra.mxu0 0.0
    %740 = vmatprep.mubr.f32.mxu0 0.0
    %741 = vmatmul.mubr.f32.gmra.mrb[0].mxu0 %v674
    %v742 = vpop.f32.mrb[0].mxu0
    %v743 = vadd.f32 0.0, %v742
    %v744 = vpop.f32.mrb[0].mxu0
    %v745 = vadd.f32 0.0, %v744
    %746 = vdwg.mxu0
    %v747 = vadd.f32 %v668, %v743
    %v748 = vadd.f32 %v669, %v745
    %v749 = vtanh.pop %v747
    %v750 = vtanh.pop %v748
    %v751 = vxor.u32 %v747, 2147483648
    %v752 = vxor.u32 %v748, 2147483648
    %v753 = vmul.f32 %v751, 1.442695
    %v754 = vpow.pop %v753
    %v755 = vmul.f32 %v752, 1.442695
    %v756 = vpow.pop %v755
    %v757 = vadd.f32 %v754, 1.0
    %v758 = vadd.f32 %v756, 1.0
    %v759 = vrcp.pop %v757
    %v760 = vmul.f32 1.0, %v759
    %v761 = vrcp.pop %v758
    %v762 = vmul.f32 1.0, %v761
    %v763 = vsel %vm172, %v749, %v760
    %v764 = vsel %vm173, %v750, %v762
    %v766 = vrot.slane %v651, 4
    %v768 = vmul.f32 %v763, %v766
    %v769 = vmul.f32 %v763, %v764
    %771 = vrot.lane.b32.xlu0 %v769, 64
    %v772 = vpop.permute.xlu0 %771
    %v774 = vadd.f32 %v768, %v772
    %v775 = vtanh.pop %v774
    %v776 = vmul.f32 %v764, %v775
    %vm777 = vcmp.gt.f32.partialorder %v58, 4.0
    %v778 = vsel %vm777, 1, 0
    %v779 = vcvt.s32.f32 %v778
    %781 = vset.pattern.permute.xlu0 0
    %782 = vperm.xlu0 %781, %v779
    %v783 = vpop.permute.xlu0 %782
    %v785 = vmul.f32 %v776, %v783
    %v786 = vadd.f32 %v667, %v785
    %v787 = vadd.f32 %v155, %v289
    %v788 = vadd.f32 %v157, %v290
    %790 = vrot.lane.b32.xlu0 %v776, 64
    %v791 = vpop.permute.xlu0 %790
    %v792 = vsel %vm63, %v791, 0
    %794 = vmatprep.subr.mxu0 %v32
    %795 = vmatpush1.msra.mxu0 %v31
    %796 = vmatprep.subr.mxu0 %v34
    %797 = vmatpush1.msra.mxu0 %v33
    %798 = vmatprep.subr.mxu0 %v36
    %799 = vmatpush1.msra.mxu0 %v35
    %800 = vmatprep.subr.mxu0 %v38
    %801 = vmatpush1.msra.mxu0 %v37
    %802 = vmatprep.subr.mxu0 %v40
    %803 = vmatpush1.msra.mxu0 %v39
    %804 = vmatprep.subr.mxu0 %v42
    %805 = vmatpush1.msra.mxu0 %v41
    %806 = vmatprep.subr.mxu0 %v44
    %807 = vmatpush1.msra.mxu0 %v43
    %808 = vmatprep.subr.mxu0 %v46
    %809 = vmatpush1.msra.mxu0 %v45
    %810 = vmatprep.subr.mxu0 0.0
    %811 = vmatpush1.msra.mxu0 0.0
    %812 = vmatprep.subr.mxu0 0.0
    %813 = vmatpush1.msra.mxu0 0.0
    %814 = vmatprep.subr.mxu0 0.0
    %815 = vmatpush1.msra.mxu0 0.0
    %816 = vmatprep.subr.mxu0 0.0
    %817 = vmatpush1.msra.mxu0 0.0
    %818 = vmatprep.subr.mxu0 0.0
    %819 = vmatpush1.msra.mxu0 0.0
    %820 = vmatprep.subr.mxu0 0.0
    %821 = vmatpush1.msra.mxu0 0.0
    %822 = vmatprep.subr.mxu0 0.0
    %823 = vmatpush1.msra.mxu0 0.0
    %824 = vmatprep.subr.mxu0 0.0
    %825 = vmatpush1.msra.mxu0 0.0
    %826 = vmatprep.subr.mxu0 0.0
    %827 = vmatpush1.msra.mxu0 0.0
    %828 = vmatprep.subr.mxu0 0.0
    %829 = vmatpush1.msra.mxu0 0.0
    %830 = vmatprep.subr.mxu0 0.0
    %831 = vmatpush1.msra.mxu0 0.0
    %832 = vmatprep.subr.mxu0 0.0
    %833 = vmatpush1.msra.mxu0 0.0
    %834 = vmatprep.subr.mxu0 0.0
    %835 = vmatpush1.msra.mxu0 0.0
    %836 = vmatprep.subr.mxu0 0.0
    %837 = vmatpush1.msra.mxu0 0.0
    %838 = vmatprep.subr.mxu0 0.0
    %839 = vmatpush1.msra.mxu0 0.0
    %840 = vmatprep.subr.mxu0 0.0
    %841 = vmatpush1.msra.mxu0 0.0
    %842 = vmatprep.subr.mxu0 0.0
    %843 = vmatpush1.msra.mxu0 0.0
    %844 = vmatprep.subr.mxu0 0.0
    %845 = vmatpush1.msra.mxu0 0.0
    %846 = vmatprep.subr.mxu0 0.0
    %847 = vmatpush1.msra.mxu0 0.0
    %848 = vmatprep.subr.mxu0 0.0
    %849 = vmatpush1.msra.mxu0 0.0
    %850 = vmatprep.subr.mxu0 0.0
    %851 = vmatpush1.msra.mxu0 0.0
    %852 = vmatprep.subr.mxu0 0.0
    %853 = vmatpush1.msra.mxu0 0.0
    %854 = vmatprep.subr.mxu0 0.0
    %855 = vmatpush1.msra.mxu0 0.0
    %856 = vmatprep.subr.mxu0 0.0
    %857 = vmatpush1.msra.mxu0 0.0
    %858 = vmatprep.mubr.f32.mxu0 0.0
    %859 = vmatmul.mubr.f32.gmra.mrb[0].mxu0 %v792
    %v860 = vpop.f32.mrb[0].mxu0
    %v861 = vadd.f32 0.0, %v860
    %v862 = vpop.f32.mrb[0].mxu0
    %v863 = vadd.f32 0.0, %v862
    %864 = vdwg.mxu0
    %v867 = vrot.slane %v861, 4
    %v868 = vrot.slane %v863, 4
    %v871 = vadd.f32 %v787, %v867
    %v872 = vadd.f32 %v788, %v868
    %v873 = vtanh.pop %v871
    %v874 = vtanh.pop %v872
    %v875 = vxor.u32 %v871, 2147483648
    %v876 = vxor.u32 %v872, 2147483648
    %v877 = vmul.f32 %v875, 1.442695
    %v878 = vpow.pop %v877
    %v879 = vmul.f32 %v876, 1.442695
    %v880 = vpow.pop %v879
    %v881 = vadd.f32 %v878, 1.0
    %v882 = vadd.f32 %v880, 1.0
    %v883 = vrcp.pop %v881
    %v884 = vmul.f32 1.0, %v883
    %v885 = vrcp.pop %v882
    %v886 = vmul.f32 1.0, %v885
    %v887 = vsel %vm172, %v873, %v884
    %v888 = vsel %vm173, %v874, %v886
    %v890 = vrot.slane %v774, 4
    %v892 = vmul.f32 %v887, %v890
    %v893 = vmul.f32 %v887, %v888
    %895 = vrot.lane.b32.xlu0 %v893, 64
    %v896 = vpop.permute.xlu0 %895
    %v898 = vadd.f32 %v892, %v896
    %v899 = vtanh.pop %v898
    %v900 = vmul.f32 %v888, %v899
    %vm901 = vcmp.gt.f32.partialorder %v58, 5.0
    %v902 = vsel %vm901, 1, 0
    %v903 = vcvt.s32.f32 %v902
    %905 = vset.pattern.permute.xlu0 0
    %906 = vperm.xlu0 %905, %v903
    %v907 = vpop.permute.xlu0 %906
    %v908 = vrot.slane %v907, 4
    %v910 = vmul.f32 %v900, %v908
    %v912 = vrot.slane %v910, 4
    %v914 = vadd.f32 %v786, %v912
    %v915 = vadd.f32 %v161, %v55
    %v916 = vadd.f32 %v163, %v56
    %v918 = vrot.slane %v900, 4
    %919 = vrot.lane.b32.xlu0 %v918, 64
    %v920 = vpop.permute.xlu0 %919
    %v921 = vsel %vm63, %v920, 0
    %923 = vmatprep.subr.mxu0 %v32
    %924 = vmatpush1.msra.mxu0 %v31
    %925 = vmatprep.subr.mxu0 %v34
    %926 = vmatpush1.msra.mxu0 %v33
    %927 = vmatprep.subr.mxu0 %v36
    %928 = vmatpush1.msra.mxu0 %v35
    %929 = vmatprep.subr.mxu0 %v38
    %930 = vmatpush1.msra.mxu0 %v37
    %931 = vmatprep.subr.mxu0 %v40
    %932 = vmatpush1.msra.mxu0 %v39
    %933 = vmatprep.subr.mxu0 %v42
    %934 = vmatpush1.msra.mxu0 %v41
    %935 = vmatprep.subr.mxu0 %v44
    %936 = vmatpush1.msra.mxu0 %v43
    %937 = vmatprep.subr.mxu0 %v46
    %938 = vmatpush1.msra.mxu0 %v45
    %939 = vmatprep.subr.mxu0 0.0
    %940 = vmatpush1.msra.mxu0 0.0
    %941 = vmatprep.subr.mxu0 0.0
    %942 = vmatpush1.msra.mxu0 0.0
    %943 = vmatprep.subr.mxu0 0.0
    %944 = vmatpush1.msra.mxu0 0.0
    %945 = vmatprep.subr.mxu0 0.0
    %946 = vmatpush1.msra.mxu0 0.0
    %947 = vmatprep.subr.mxu0 0.0
    %948 = vmatpush1.msra.mxu0 0.0
    %949 = vmatprep.subr.mxu0 0.0
    %950 = vmatpush1.msra.mxu0 0.0
    %951 = vmatprep.subr.mxu0 0.0
    %952 = vmatpush1.msra.mxu0 0.0
    %953 = vmatprep.subr.mxu0 0.0
    %954 = vmatpush1.msra.mxu0 0.0
    %955 = vmatprep.subr.mxu0 0.0
    %956 = vmatpush1.msra.mxu0 0.0
    %957 = vmatprep.subr.mxu0 0.0
    %958 = vmatpush1.msra.mxu0 0.0
    %959 = vmatprep.subr.mxu0 0.0
    %960 = vmatpush1.msra.mxu0 0.0
    %961 = vmatprep.subr.mxu0 0.0
    %962 = vmatpush1.msra.mxu0 0.0
    %963 = vmatprep.subr.mxu0 0.0
    %964 = vmatpush1.msra.mxu0 0.0
    %965 = vmatprep.subr.mxu0 0.0
    %966 = vmatpush1.msra.mxu0 0.0
    %967 = vmatprep.subr.mxu0 0.0
    %968 = vmatpush1.msra.mxu0 0.0
    %969 = vmatprep.subr.mxu0 0.0
    %970 = vmatpush1.msra.mxu0 0.0
    %971 = vmatprep.subr.mxu0 0.0
    %972 = vmatpush1.msra.mxu0 0.0
    %973 = vmatprep.subr.mxu0 0.0
    %974 = vmatpush1.msra.mxu0 0.0
    %975 = vmatprep.subr.mxu0 0.0
    %976 = vmatpush1.msra.mxu0 0.0
    %977 = vmatprep.subr.mxu0 0.0
    %978 = vmatpush1.msra.mxu0 0.0
    %979 = vmatprep.subr.mxu0 0.0
    %980 = vmatpush1.msra.mxu0 0.0
    %981 = vmatprep.subr.mxu0 0.0
    %982 = vmatpush1.msra.mxu0 0.0
    %983 = vmatprep.subr.mxu0 0.0
    %984 = vmatpush1.msra.mxu0 0.0
    %985 = vmatprep.subr.mxu0 0.0
    %986 = vmatpush1.msra.mxu0 0.0
    %987 = vmatprep.mubr.f32.mxu0 0.0
    %988 = vmatmul.mubr.f32.gmra.mrb[0].mxu0 %v921
    %v989 = vpop.f32.mrb[0].mxu0
    %v990 = vadd.f32 0.0, %v989
    %v991 = vpop.f32.mrb[0].mxu0
    %v992 = vadd.f32 0.0, %v991
    %993 = vdwg.mxu0
    %v994 = vadd.f32 %v915, %v990
    %v995 = vadd.f32 %v916, %v992
    %v996 = vtanh.pop %v994
    %v997 = vtanh.pop %v995
    %v998 = vxor.u32 %v994, 2147483648
    %v999 = vxor.u32 %v995, 2147483648
    %v1000 = vmul.f32 %v998, 1.442695
    %v1001 = vpow.pop %v1000
    %v1002 = vmul.f32 %v999, 1.442695
    %v1003 = vpow.pop %v1002
    %v1004 = vadd.f32 %v1001, 1.0
    %v1005 = vadd.f32 %v1003, 1.0
    %v1006 = vrcp.pop %v1004
    %v1007 = vmul.f32 1.0, %v1006
    %v1008 = vrcp.pop %v1005
    %v1009 = vmul.f32 1.0, %v1008
    %v1010 = vsel %vm172, %v996, %v1007
    %v1011 = vsel %vm173, %v997, %v1009
    %v1013 = vrot.slane %v898, 4
    %v1015 = vmul.f32 %v1010, %v1013
    %v1016 = vmul.f32 %v1010, %v1011
    %1018 = vrot.lane.b32.xlu0 %v1016, 64
    %v1019 = vpop.permute.xlu0 %1018
    %v1021 = vadd.f32 %v1015, %v1019
    %v1022 = vtanh.pop %v1021
    %v1023 = vmul.f32 %v1011, %v1022
    %vm1024 = vcmp.gt.f32.partialorder %v58, 6.0
    %v1025 = vsel %vm1024, 1, 0
    %v1026 = vcvt.s32.f32 %v1025
    %1028 = vset.pattern.permute.xlu0 0
    %1029 = vperm.xlu0 %1028, %v1026
    %v1030 = vpop.permute.xlu0 %1029
    %v1032 = vmul.f32 %v1023, %v1030
    %v1033 = vadd.f32 %v914, %v1032
    %v1034 = vadd.f32 %v161, %v289
    %v1035 = vadd.f32 %v163, %v290
    %1037 = vrot.lane.b32.xlu0 %v1023, 64
    %v1038 = vpop.permute.xlu0 %1037
    %v1039 = vsel %vm63, %v1038, 0
    %1041 = vmatprep.subr.mxu0 %v32
    %1042 = vmatpush1.msra.mxu0 %v31
    %1043 = vmatprep.subr.mxu0 %v34
    %1044 = vmatpush1.msra.mxu0 %v33
    %1045 = vmatprep.subr.mxu0 %v36
    %1046 = vmatpush1.msra.mxu0 %v35
    %1047 = vmatprep.subr.mxu0 %v38
    %1048 = vmatpush1.msra.mxu0 %v37
    %1049 = vmatprep.subr.mxu0 %v40
    %1050 = vmatpush1.msra.mxu0 %v39
    %1051 = vmatprep.subr.mxu0 %v42
    %1052 = vmatpush1.msra.mxu0 %v41
    %1053 = vmatprep.subr.mxu0 %v44
    %1054 = vmatpush1.msra.mxu0 %v43
    %1055 = vmatprep.subr.mxu0 %v46
    %1056 = vmatpush1.msra.mxu0 %v45
    %1057 = vmatprep.subr.mxu0 0.0
    %1058 = vmatpush1.msra.mxu0 0.0
    %1059 = vmatprep.subr.mxu0 0.0
    %1060 = vmatpush1.msra.mxu0 0.0
    %1061 = vmatprep.subr.mxu0 0.0
    %1062 = vmatpush1.msra.mxu0 0.0
    %1063 = vmatprep.subr.mxu0 0.0
    %1064 = vmatpush1.msra.mxu0 0.0
    %1065 = vmatprep.subr.mxu0 0.0
    %1066 = vmatpush1.msra.mxu0 0.0
    %1067 = vmatprep.subr.mxu0 0.0
    %1068 = vmatpush1.msra.mxu0 0.0
    %1069 = vmatprep.subr.mxu0 0.0
    %1070 = vmatpush1.msra.mxu0 0.0
    %1071 = vmatprep.subr.mxu0 0.0
    %1072 = vmatpush1.msra.mxu0 0.0
    %1073 = vmatprep.subr.mxu0 0.0
    %1074 = vmatpush1.msra.mxu0 0.0
    %1075 = vmatprep.subr.mxu0 0.0
    %1076 = vmatpush1.msra.mxu0 0.0
    %1077 = vmatprep.subr.mxu0 0.0
    %1078 = vmatpush1.msra.mxu0 0.0
    %1079 = vmatprep.subr.mxu0 0.0
    %1080 = vmatpush1.msra.mxu0 0.0
    %1081 = vmatprep.subr.mxu0 0.0
    %1082 = vmatpush1.msra.mxu0 0.0
    %1083 = vmatprep.subr.mxu0 0.0
    %1084 = vmatpush1.msra.mxu0 0.0
    %1085 = vmatprep.subr.mxu0 0.0
    %1086 = vmatpush1.msra.mxu0 0.0
    %1087 = vmatprep.subr.mxu0 0.0
    %1088 = vmatpush1.msra.mxu0 0.0
    %1089 = vmatprep.subr.mxu0 0.0
    %1090 = vmatpush1.msra.mxu0 0.0
    %1091 = vmatprep.subr.mxu0 0.0
    %1092 = vmatpush1.msra.mxu0 0.0
    %1093 = vmatprep.subr.mxu0 0.0
    %1094 = vmatpush1.msra.mxu0 0.0
    %1095 = vmatprep.subr.mxu0 0.0
    %1096 = vmatpush1.msra.mxu0 0.0
    %1097 = vmatprep.subr.mxu0 0.0
    %1098 = vmatpush1.msra.mxu0 0.0
    %1099 = vmatprep.subr.mxu0 0.0
    %1100 = vmatpush1.msra.mxu0 0.0
    %1101 = vmatprep.subr.mxu0 0.0
    %1102 = vmatpush1.msra.mxu0 0.0
    %1103 = vmatprep.subr.mxu0 0.0
    %1104 = vmatpush1.msra.mxu0 0.0
    %1105 = vmatprep.mubr.f32.mxu0 0.0
    %1106 = vmatmul.mubr.f32.gmra.mrb[0].mxu0 %v1039
    %v1107 = vpop.f32.mrb[0].mxu0
    %v1108 = vadd.f32 0.0, %v1107
    %v1109 = vpop.f32.mrb[0].mxu0
    %v1110 = vadd.f32 0.0, %v1109
    %1111 = vdwg.mxu0
    %v1114 = vrot.slane %v1108, 4
    %v1115 = vrot.slane %v1110, 4
    %v1118 = vadd.f32 %v1034, %v1114
    %v1119 = vadd.f32 %v1035, %v1115
    %v1120 = vtanh.pop %v1118
    %v1121 = vtanh.pop %v1119
    %v1122 = vxor.u32 %v1118, 2147483648
    %v1123 = vxor.u32 %v1119, 2147483648
    %v1124 = vmul.f32 %v1122, 1.442695
    %v1125 = vpow.pop %v1124
    %v1126 = vmul.f32 %v1123, 1.442695
    %v1127 = vpow.pop %v1126
    %v1128 = vadd.f32 %v1125, 1.0
    %v1129 = vadd.f32 %v1127, 1.0
    %v1130 = vrcp.pop %v1128
    %v1131 = vmul.f32 1.0, %v1130
    %v1132 = vrcp.pop %v1129
    %v1133 = vmul.f32 1.0, %v1132
    %v1134 = vsel %vm172, %v1120, %v1131
    %v1135 = vsel %vm173, %v1121, %v1133
    %v1137 = vrot.slane %v1021, 4
    %v1139 = vmul.f32 %v1134, %v1137
    %v1140 = vmul.f32 %v1134, %v1135
    %1142 = vrot.lane.b32.xlu0 %v1140, 64
    %v1143 = vpop.permute.xlu0 %1142
    %v1145 = vadd.f32 %v1139, %v1143
    %v1146 = vtanh.pop %v1145
    %v1147 = vmul.f32 %v1135, %v1146
    %vm1148 = vcmp.gt.f32.partialorder %v58, 7.0
    %v1149 = vsel %vm1148, 1, 0
    %v1150 = vcvt.s32.f32 %v1149
    %1152 = vset.pattern.permute.xlu0 0
    %1153 = vperm.xlu0 %1152, %v1150
    %v1154 = vpop.permute.xlu0 %1153
    %v1155 = vrot.slane %v1154, 4
    %v1157 = vmul.f32 %v1147, %v1155
    %v1159 = vrot.slane %v1157, 4
    %v1161 = vadd.f32 %v1033, %v1159
    %v1163 = vrot.slane %v1161, 2
    %v1165 = vadd.f32 %v1161, %v1163
    %1167 = vrot.lane.b32.xlu0 %v1165, 64
    %v1168 = vpop.permute.xlu0 %1167
    %v1169 = vsel %vm63, %v1168, 0
    %1171 = vmatprep.subr.mxu0 0.0
    %1172 = vmatpush1.msra.mxu0 %v47
    %1173 = vmatprep.subr.mxu0 0.0
    %1174 = vmatpush1.msra.mxu0 %v48
    %1175 = vmatprep.subr.mxu0 0.0
    %1176 = vmatpush1.msra.mxu0 %v49
    %1177 = vmatprep.subr.mxu0 0.0
    %1178 = vmatpush1.msra.mxu0 %v50
    %1179 = vmatprep.subr.mxu0 0.0
    %1180 = vmatpush1.msra.mxu0 %v51
    %1181 = vmatprep.subr.mxu0 0.0
    %1182 = vmatpush1.msra.mxu0 %v52
    %1183 = vmatprep.subr.mxu0 0.0
    %1184 = vmatpush1.msra.mxu0 %v53
    %1185 = vmatprep.subr.mxu0 0.0
    %1186 = vmatpush1.msra.mxu0 %v54
    %1187 = vmatprep.subr.mxu0 0.0
    %1188 = vmatpush1.msra.mxu0 0.0
    %1189 = vmatprep.subr.mxu0 0.0
    %1190 = vmatpush1.msra.mxu0 0.0
    %1191 = vmatprep.subr.mxu0 0.0
    %1192 = vmatpush1.msra.mxu0 0.0
    %1193 = vmatprep.subr.mxu0 0.0
    %1194 = vmatpush1.msra.mxu0 0.0
    %1195 = vmatprep.subr.mxu0 0.0
    %1196 = vmatpush1.msra.mxu0 0.0
    %1197 = vmatprep.subr.mxu0 0.0
    %1198 = vmatpush1.msra.mxu0 0.0
    %1199 = vmatprep.subr.mxu0 0.0
    %1200 = vmatpush1.msra.mxu0 0.0
    %1201 = vmatprep.subr.mxu0 0.0
    %1202 = vmatpush1.msra.mxu0 0.0
    %1203 = vmatprep.subr.mxu0 0.0
    %1204 = vmatpush1.msra.mxu0 0.0
    %1205 = vmatprep.subr.mxu0 0.0
    %1206 = vmatpush1.msra.mxu0 0.0
    %1207 = vmatprep.subr.mxu0 0.0
    %1208 = vmatpush1.msra.mxu0 0.0
    %1209 = vmatprep.subr.mxu0 0.0
    %1210 = vmatpush1.msra.mxu0 0.0
    %1211 = vmatprep.subr.mxu0 0.0
    %1212 = vmatpush1.msra.mxu0 0.0
    %1213 = vmatprep.subr.mxu0 0.0
    %1214 = vmatpush1.msra.mxu0 0.0
    %1215 = vmatprep.subr.mxu0 0.0
    %1216 = vmatpush1.msra.mxu0 0.0
    %1217 = vmatprep.subr.mxu0 0.0
    %1218 = vmatpush1.msra.mxu0 0.0
    %1219 = vmatprep.subr.mxu0 0.0
    %1220 = vmatpush1.msra.mxu0 0.0
    %1221 = vmatprep.subr.mxu0 0.0
    %1222 = vmatpush1.msra.mxu0 0.0
    %1223 = vmatprep.subr.mxu0 0.0
    %1224 = vmatpush1.msra.mxu0 0.0
    %1225 = vmatprep.subr.mxu0 0.0
    %1226 = vmatpush1.msra.mxu0 0.0
    %1227 = vmatprep.subr.mxu0 0.0
    %1228 = vmatpush1.msra.mxu0 0.0
    %1229 = vmatprep.subr.mxu0 0.0
    %1230 = vmatpush1.msra.mxu0 0.0
    %1231 = vmatprep.subr.mxu0 0.0
    %1232 = vmatpush1.msra.mxu0 0.0
    %1233 = vmatprep.subr.mxu0 0.0
    %1234 = vmatpush1.msra.mxu0 0.0
    %1235 = vmatprep.mubr.f32.mxu0 0.0
    %1236 = vmatmul.mubr.f32.gmra.mrb[0].mxu0 %v1169
    %v1237 = vpop.f32.mrb[0].mxu0
    %v1238 = vadd.f32 %v57, %v1237
    %v1239 = vpop.f32.mrb[0].mxu0
    %1240 = vdwg.mxu0
    %vm1241 = vcmask 9216
    %1242 = vst.msk [vmem:[#allocation2] sm:$0x3] %vm1241, %v1238
    // Predicated region
    $region14: #{model_forward.1} parent=1 // pred_check
      _
    $region15: #{model_forward.1} parent=1 // pred_check_branch
      %1244 = sbr.rel (0) target = $region17
    $region16: #{model_forward.1} parent=1 // pred_region
      %s1246 = ssub.s32 32, 32
      %1247 = vsyncadd [#allocation3], %s1246
      %s1249 = sshll.u32 [#allocation2], 4
      %s1250 = int_to_ptr.vmem [resolvable:$true] %s1249
      %1252 = dma.vmem_to_hbm [thread:$0]  %s1250, 32, %s3, [#allocation3]
    $region17: #{model_forward.1} parent=1 // pred_fallthru
      _
    // Predicated region
    $region18: #{model_forward.1} parent=1 // pred_check
      _
    $region19: #{model_forward.1} parent=1 // pred_check_branch
      %1254 = sbr.rel (0) target = $region21
    $region20: #{model_forward.1} parent=1 // pred_region
      %1255 = dma.done [#allocation3], 32
    $region21: #{model_forward.1} parent=1 // pred_fallthru
      _
    %1256 = vsyncpa [#allocation3], 1

</llo_original>
